<compile_context>
chip_gen: v7x
topology: tpu7x:2x2x1
jax: 0.10.0
libtpu: 0.0.40
codegen_flags: <defaults>
</compile_context>

<pallas_src>
import jax
import jax.numpy as jnp
from jax.experimental import pallas as pl
from jax.experimental.pallas import tpu as pltpu


def relu_conv1x1_kernel(x_ref, w_ref, o_ref):
    # x_ref: (Cin, hw_tile), w_ref: (Cout, Cin), o_ref: (Cout, hw_tile)
    x = jnp.maximum(x_ref[...], 0.0)                      # fused ReLU (hot path)
    o_ref[...] = jnp.dot(
        w_ref[...], x, preferred_element_type=jnp.float32
    ).astype(o_ref.dtype)


def _pick_tile_hw(hw):
    # Tile the spatial axis when it is large and 128-aligned; otherwise take it whole.
    for t in (512, 256, 128):
        if hw % t == 0:
            return t
    return hw


def _vmem_budget_bytes(cin, cout, tile_hw, itemsize=4):
    # double-buffered x/out tiles + (conservatively double-buffered) resident weight
    x_b = cin * tile_hw * itemsize
    w_b = cout * cin * itemsize
    o_b = cout * tile_hw * itemsize
    need = 2 * (x_b + w_b + o_b)
    # 2x headroom, floor 8 MiB, cap 48 MiB so the plan ports to v7x (64 MiB physical)
    return int(min(max(2 * need, 8 << 20), 48 << 20))


def relu_conv2d_1x1(x_nchw, w_oihw):
    """ReLU followed by a 1x1 conv (no bias), PyTorch NCHW semantics."""
    N, Cin, H, W = x_nchw.shape
    Cout = w_oihw.shape[0]
    HW = H * W

    # Native-layout views — NO transposes, only reshapes (free at HBM level).
    x3d = x_nchw.reshape(N, Cin, HW)
    w2d = w_oihw.reshape(Cout, Cin)

    tile_hw = _pick_tile_hw(HW)
    grid = (N, HW // tile_hw)

    out3d = pl.pallas_call(
        relu_conv1x1_kernel,
        out_shape=jax.ShapeDtypeStruct((N, Cout, HW), x_nchw.dtype),
        grid=grid,
        in_specs=[
            # per-(batch, spatial-tile) activation block; leading batch dim squeezed
            pl.BlockSpec((None, Cin, tile_hw), lambda n, s: (n, 0, s)),
            # weight held fully resident across the whole grid
            pl.BlockSpec((Cout, Cin), lambda n, s: (0, 0)),
        ],
        out_specs=pl.BlockSpec((None, Cout, tile_hw), lambda n, s: (n, 0, s)),
        compiler_params=pltpu.CompilerParams(
            # both grid axes are independent -> megacore / dual-TC sharding on v7x
            dimension_semantics=("parallel", "parallel"),
            vmem_limit_bytes=_vmem_budget_bytes(Cin, Cout, tile_hw),
        ),
    )(x3d, w2d)

    return out3d.reshape(N, Cout, H, W)


if __name__ == "__main__":
    key = jax.random.PRNGKey(0)
    kx, kw = jax.random.split(key)

    # Shapes implied by the module: x [1, 1504, 7, 7], conv weight [128, 1504, 1, 1]
    N, Cin, H, W = 1, 1504, 7, 7
    Cout = 128

    x = jax.random.normal(kx, (N, Cin, H, W), dtype=jnp.float32)
    # deterministic synthetic weight (kaiming-ish scale)
    w = jax.random.normal(kw, (Cout, Cin, 1, 1), dtype=jnp.float32) * (2.0 / Cin) ** 0.5

    out = relu_conv2d_1x1(x, w)
    out = jax.block_until_ready(out)

    # reference check in plain JAX
    x_relu = jnp.maximum(x, 0.0)
    ref = jnp.einsum("nchw,oc->nohw", x_relu, w.reshape(Cout, Cin))
    assert out.shape == (N, Cout, H, W), out.shape
    assert jnp.allclose(out, ref, atol=1e-4, rtol=1e-4), "mismatch vs reference"

    print("KERNEL_OK")
</pallas_src>

<mosaic_0001>
module attributes {stable_mosaic.version = 11 : i64} {
  func.func @relu_conv1x1_kernel(%arg0: i32, %arg1: i32, %arg2: memref<1x1504x49xf32, #tpu.memory_space<vmem>>, %arg3: memref<128x1504xf32, #tpu.memory_space<vmem>>, %arg4: memref<1x128x49xf32, #tpu.memory_space<vmem>>) attributes {dimension_semantics = [#tpu.dimension_semantics<parallel>, #tpu.dimension_semantics<parallel>], iteration_bounds = array<i64: 1, 1>, scalar_prefetch = 0 : i64, scratch_operands = 0 : i64, tpu.core_type = #tpu.core_type<tc>, window_params = [{transform_indices = @transform_0, window_bounds = array<i64: 1, 1504, 49>}, {pipeline_mode = #tpu.pipeline_mode<synchronous>, transform_indices = @transform_1, window_bounds = array<i64: 128, 1504>}, {transform_indices = @transform_2, window_bounds = array<i64: 1, 128, 49>}]} {
    %c0 = arith.constant 0 : index
    %c0_0 = arith.constant 0 : index
    %c0_1 = arith.constant 0 : index
    %0 = vector.load %arg2[%c0, %c0_0, %c0_1] : memref<1x1504x49xf32, #tpu.memory_space<vmem>>, vector<1x1504x49xf32>
    %1 = vector.shape_cast %0 : vector<1x1504x49xf32> to vector<1504x49xf32>
    %cst = arith.constant 0.000000e+00 : f32
    %2 = vector.broadcast %cst : f32 to vector<1504x49xf32>
    %3 = arith.maximumf %1, %2 : vector<1504x49xf32>
    %c0_2 = arith.constant 0 : index
    %c0_3 = arith.constant 0 : index
    %4 = vector.load %arg3[%c0_2, %c0_3] : memref<128x1504xf32, #tpu.memory_space<vmem>>, vector<128x1504xf32>
    %cst_4 = arith.constant dense<0.000000e+00> : vector<128x49xf32>
    %5 = tpu.matmul %4, %3, %cst_4 {dimension_numbers = #tpu.dot_dimension_numbers<[1], [0], [0], [1], [0, 0, 1, 1], [], []>} : vector<128x1504xf32>, vector<1504x49xf32>, vector<128x49xf32> -> vector<128x49xf32>
    %c0_5 = arith.constant 0 : index
    %c0_6 = arith.constant 0 : index
    %c0_7 = arith.constant 0 : index
    %6 = vector.load %arg4[%c0_5, %c0_6, %c0_7] : memref<1x128x49xf32, #tpu.memory_space<vmem>>, vector<1x128x49xf32>
    %7 = vector.shape_cast %6 : vector<1x128x49xf32> to vector<128x49xf32>
    %8 = vector.shape_cast %5 : vector<128x49xf32> to vector<1x128x49xf32>
    tpu.vector_store %arg4[%c0_5, %c0_6, %c0_7], %8 {strides = array<i32>} : memref<1x128x49xf32, #tpu.memory_space<vmem>>, vector<1x128x49xf32>,
    return
  }
  func.func @transform_0(%arg0: i32, %arg1: i32) -> (i32, i32, i32) {
    %c0_i32 = arith.constant 0 : i32
    %c0_i32_0 = arith.constant 0 : i32
    return %arg0, %c0_i32, %arg1 : i32, i32, i32
  }
  func.func @transform_1(%arg0: i32, %arg1: i32) -> (i32, i32) {
    %c0_i32 = arith.constant 0 : i32
    %c0_i32_0 = arith.constant 0 : i32
    %c0_i32_1 = arith.constant 0 : i32
    return %c0_i32, %c0_i32_0 : i32, i32
  }
  func.func @transform_2(%arg0: i32, %arg1: i32) -> (i32, i32, i32) {
    %c0_i32 = arith.constant 0 : i32
    %c0_i32_0 = arith.constant 0 : i32
    return %arg0, %c0_i32, %arg1 : i32, i32, i32
  }
}

</mosaic_0001>

<llo_original>
// kernel: tpu_custom_call.1
$region0: #{tpu_custom_call.1}
  #allocation0 [shape = 'u32[]', space=smem, size = 0x4, offset = 0x4, fixed_abs, tag = 'smem constant byte address 0x4 - core index']
  #allocation1 [shape = 'u32[144,128]{1,0:T(1,128)}', space=vmem, size = 0x12000, scoped, tag = 'internal scratch']
  %s0 = inlined_call_operand.vmem [shape: f32[1,1504,49], index: 0, kind: input, shape index: {}]
  %s1 = inlined_call_operand.vmem [shape: f32[128,1504], index: 1, kind: input, shape index: {}]
  %s2 = inlined_call_operand.vmem [shape: f32[1,128,49], index: 2, kind: output, shape index: {}]
  %s3 = sld [smem:[#allocation0]]
  $region18: #{tpu_custom_call.1} parent=0
    _
  %s5 = ssub.s32 1, %s3
  %s6 = scalar_select 0, %s5, %s3
  // Predicated region
  $region2: #{tpu_custom_call.1} parent=0 // pred_check
    _
  $region3: #{tpu_custom_call.1} parent=0 // pred_check_branch
    %8 = sbr.rel (0) target = $region5
  $region4: #{tpu_custom_call.1} parent=0 // pred_region
    _
  $region5: #{tpu_custom_call.1} parent=0 // pred_fallthru
    _
  // Predicated region
  $region6: #{tpu_custom_call.1} parent=0 // pred_check
    _
  $region7: #{tpu_custom_call.1} parent=0 // pred_check_branch
    %10 = sbr.rel (0) target = $region9
  $region8: #{tpu_custom_call.1} parent=0 // pred_region
    _
  $region9: #{tpu_custom_call.1} parent=0 // pred_fallthru
    _
  %v11 = vld [vmem:[%s0] sm:$0xff]
  %v12 = vld [vmem:[%s0 + $0x8] sm:$0xff]
  %v13 = vld [vmem:[%s0 + $0x10] sm:$0xff]
  %v14 = vld [vmem:[%s0 + $0x18] sm:$0xff]
  %v15 = vld [vmem:[%s0 + $0x20] sm:$0xff]
  %v16 = vld [vmem:[%s0 + $0x28] sm:$0xff]
  %v17 = vld [vmem:[%s0 + $0x30] sm:$0xff]
  %v18 = vld [vmem:[%s0 + $0x38] sm:$0xff]
  %v19 = vld [vmem:[%s0 + $0x40] sm:$0xff]
  %v20 = vld [vmem:[%s0 + $0x48] sm:$0xff]
  %v21 = vld [vmem:[%s0 + $0x50] sm:$0xff]
  %v22 = vld [vmem:[%s0 + $0x58] sm:$0xff]
  %v23 = vld [vmem:[%s0 + $0x60] sm:$0xff]
  %v24 = vld [vmem:[%s0 + $0x68] sm:$0xff]
  %v25 = vld [vmem:[%s0 + $0x70] sm:$0xff]
  %v26 = vld [vmem:[%s0 + $0x78] sm:$0xff]
  %v27 = vld [vmem:[%s0 + $0x80] sm:$0xff]
  %v28 = vld [vmem:[%s0 + $0x88] sm:$0xff]
  %v29 = vld [vmem:[%s0 + $0x90] sm:$0xff]
  %v30 = vld [vmem:[%s0 + $0x98] sm:$0xff]
  %v31 = vld [vmem:[%s0 + $0xa0] sm:$0xff]
  %v32 = vld [vmem:[%s0 + $0xa8] sm:$0xff]
  %v33 = vld [vmem:[%s0 + $0xb0] sm:$0xff]
  %v34 = vld [vmem:[%s0 + $0xb8] sm:$0xff]
  %v35 = vld [vmem:[%s0 + $0xc0] sm:$0xff]
  %v36 = vld [vmem:[%s0 + $0xc8] sm:$0xff]
  %v37 = vld [vmem:[%s0 + $0xd0] sm:$0xff]
  %v38 = vld [vmem:[%s0 + $0xd8] sm:$0xff]
  %v39 = vld [vmem:[%s0 + $0xe0] sm:$0xff]
  %v40 = vld [vmem:[%s0 + $0xe8] sm:$0xff]
  %v41 = vld [vmem:[%s0 + $0xf0] sm:$0xff]
  %v42 = vld [vmem:[%s0 + $0xf8] sm:$0xff]
  %v43 = vld [vmem:[%s0 + $0x100] sm:$0xff]
  %v44 = vld [vmem:[%s0 + $0x108] sm:$0xff]
  %v45 = vld [vmem:[%s0 + $0x110] sm:$0xff]
  %v46 = vld [vmem:[%s0 + $0x118] sm:$0xff]
  %v47 = vld [vmem:[%s0 + $0x120] sm:$0xff]
  %v48 = vld [vmem:[%s0 + $0x128] sm:$0xff]
  %v49 = vld [vmem:[%s0 + $0x130] sm:$0xff]
  %v50 = vld [vmem:[%s0 + $0x138] sm:$0xff]
  %v51 = vld [vmem:[%s0 + $0x140] sm:$0xff]
  %v52 = vld [vmem:[%s0 + $0x148] sm:$0xff]
  %v53 = vld [vmem:[%s0 + $0x150] sm:$0xff]
  %v54 = vld [vmem:[%s0 + $0x158] sm:$0xff]
  %v55 = vld [vmem:[%s0 + $0x160] sm:$0xff]
  %v56 = vld [vmem:[%s0 + $0x168] sm:$0xff]
  %v57 = vld [vmem:[%s0 + $0x170] sm:$0xff]
  %v58 = vld [vmem:[%s0 + $0x178] sm:$0xff]
  %v59 = vld [vmem:[%s0 + $0x180] sm:$0xff]
  %v60 = vld [vmem:[%s0 + $0x188] sm:$0xff]
  %v61 = vld [vmem:[%s0 + $0x190] sm:$0xff]
  %v62 = vld [vmem:[%s0 + $0x198] sm:$0xff]
  %v63 = vld [vmem:[%s0 + $0x1a0] sm:$0xff]
  %v64 = vld [vmem:[%s0 + $0x1a8] sm:$0xff]
  %v65 = vld [vmem:[%s0 + $0x1b0] sm:$0xff]
  %v66 = vld [vmem:[%s0 + $0x1b8] sm:$0xff]
  %v67 = vld [vmem:[%s0 + $0x1c0] sm:$0xff]
  %v68 = vld [vmem:[%s0 + $0x1c8] sm:$0xff]
  %v69 = vld [vmem:[%s0 + $0x1d0] sm:$0xff]
  %v70 = vld [vmem:[%s0 + $0x1d8] sm:$0xff]
  %v71 = vld [vmem:[%s0 + $0x1e0] sm:$0xff]
  %v72 = vld [vmem:[%s0 + $0x1e8] sm:$0xff]
  %v73 = vld [vmem:[%s0 + $0x1f0] sm:$0xff]
  %v74 = vld [vmem:[%s0 + $0x1f8] sm:$0xff]
  %v75 = vld [vmem:[%s0 + $0x200] sm:$0xff]
  %v76 = vld [vmem:[%s0 + $0x208] sm:$0xff]
  %v77 = vld [vmem:[%s0 + $0x210] sm:$0xff]
  %v78 = vld [vmem:[%s0 + $0x218] sm:$0xff]
  %v79 = vld [vmem:[%s0 + $0x220] sm:$0xff]
  %v80 = vld [vmem:[%s0 + $0x228] sm:$0xff]
  %v81 = vld [vmem:[%s0 + $0x230] sm:$0xff]
  %v82 = vld [vmem:[%s0 + $0x238] sm:$0xff]
  %v83 = vld [vmem:[%s0 + $0x240] sm:$0xff]
  %v84 = vld [vmem:[%s0 + $0x248] sm:$0xff]
  %v85 = vld [vmem:[%s0 + $0x250] sm:$0xff]
  %v86 = vld [vmem:[%s0 + $0x258] sm:$0xff]
  %v87 = vld [vmem:[%s0 + $0x260] sm:$0xff]
  %v88 = vld [vmem:[%s0 + $0x268] sm:$0xff]
  %v89 = vld [vmem:[%s0 + $0x270] sm:$0xff]
  %v90 = vld [vmem:[%s0 + $0x278] sm:$0xff]
  %v91 = vld [vmem:[%s0 + $0x280] sm:$0xff]
  %v92 = vld [vmem:[%s0 + $0x288] sm:$0xff]
  %v93 = vld [vmem:[%s0 + $0x290] sm:$0xff]
  %v94 = vld [vmem:[%s0 + $0x298] sm:$0xff]
  %v95 = vld [vmem:[%s0 + $0x2a0] sm:$0xff]
  %v96 = vld [vmem:[%s0 + $0x2a8] sm:$0xff]
  %v97 = vld [vmem:[%s0 + $0x2b0] sm:$0xff]
  %v98 = vld [vmem:[%s0 + $0x2b8] sm:$0xff]
  %v99 = vld [vmem:[%s0 + $0x2c0] sm:$0xff]
  %v100 = vld [vmem:[%s0 + $0x2c8] sm:$0xff]
  %v101 = vld [vmem:[%s0 + $0x2d0] sm:$0xff]
  %v102 = vld [vmem:[%s0 + $0x2d8] sm:$0xff]
  %v103 = vld [vmem:[%s0 + $0x2e0] sm:$0xff]
  %v104 = vld [vmem:[%s0 + $0x2e8] sm:$0xff]
  %v105 = vld [vmem:[%s0 + $0x2f0] sm:$0xff]
  %v106 = vld [vmem:[%s0 + $0x2f8] sm:$0xff]
  %v107 = vld [vmem:[%s0 + $0x300] sm:$0xff]
  %v108 = vld [vmem:[%s0 + $0x308] sm:$0xff]
  %v109 = vld [vmem:[%s0 + $0x310] sm:$0xff]
  %v110 = vld [vmem:[%s0 + $0x318] sm:$0xff]
  %v111 = vld [vmem:[%s0 + $0x320] sm:$0xff]
  %v112 = vld [vmem:[%s0 + $0x328] sm:$0xff]
  %v113 = vld [vmem:[%s0 + $0x330] sm:$0xff]
  %v114 = vld [vmem:[%s0 + $0x338] sm:$0xff]
  %v115 = vld [vmem:[%s0 + $0x340] sm:$0xff]
  %v116 = vld [vmem:[%s0 + $0x348] sm:$0xff]
  %v117 = vld [vmem:[%s0 + $0x350] sm:$0xff]
  %v118 = vld [vmem:[%s0 + $0x358] sm:$0xff]
  %v119 = vld [vmem:[%s0 + $0x360] sm:$0xff]
  %v120 = vld [vmem:[%s0 + $0x368] sm:$0xff]
  %v121 = vld [vmem:[%s0 + $0x370] sm:$0xff]
  %v122 = vld [vmem:[%s0 + $0x378] sm:$0xff]
  %v123 = vld [vmem:[%s0 + $0x380] sm:$0xff]
  %v124 = vld [vmem:[%s0 + $0x388] sm:$0xff]
  %v125 = vld [vmem:[%s0 + $0x390] sm:$0xff]
  %v126 = vld [vmem:[%s0 + $0x398] sm:$0xff]
  %v127 = vld [vmem:[%s0 + $0x3a0] sm:$0xff]
  %v128 = vld [vmem:[%s0 + $0x3a8] sm:$0xff]
  %v129 = vld [vmem:[%s0 + $0x3b0] sm:$0xff]
  %v130 = vld [vmem:[%s0 + $0x3b8] sm:$0xff]
  %v131 = vld [vmem:[%s0 + $0x3c0] sm:$0xff]
  %v132 = vld [vmem:[%s0 + $0x3c8] sm:$0xff]
  %v133 = vld [vmem:[%s0 + $0x3d0] sm:$0xff]
  %v134 = vld [vmem:[%s0 + $0x3d8] sm:$0xff]
  %v135 = vld [vmem:[%s0 + $0x3e0] sm:$0xff]
  %v136 = vld [vmem:[%s0 + $0x3e8] sm:$0xff]
  %v137 = vld [vmem:[%s0 + $0x3f0] sm:$0xff]
  %v138 = vld [vmem:[%s0 + $0x3f8] sm:$0xff]
  %v139 = vld [vmem:[%s0 + $0x400] sm:$0xff]
  %v140 = vld [vmem:[%s0 + $0x408] sm:$0xff]
  %v141 = vld [vmem:[%s0 + $0x410] sm:$0xff]
  %v142 = vld [vmem:[%s0 + $0x418] sm:$0xff]
  %v143 = vld [vmem:[%s0 + $0x420] sm:$0xff]
  %v144 = vld [vmem:[%s0 + $0x428] sm:$0xff]
  %v145 = vld [vmem:[%s0 + $0x430] sm:$0xff]
  %v146 = vld [vmem:[%s0 + $0x438] sm:$0xff]
  %v147 = vld [vmem:[%s0 + $0x440] sm:$0xff]
  %v148 = vld [vmem:[%s0 + $0x448] sm:$0xff]
  %v149 = vld [vmem:[%s0 + $0x450] sm:$0xff]
  %v150 = vld [vmem:[%s0 + $0x458] sm:$0xff]
  %v151 = vld [vmem:[%s0 + $0x460] sm:$0xff]
  %v152 = vld [vmem:[%s0 + $0x468] sm:$0xff]
  %v153 = vld [vmem:[%s0 + $0x470] sm:$0xff]
  %v154 = vld [vmem:[%s0 + $0x478] sm:$0xff]
  %v155 = vld [vmem:[%s0 + $0x480] sm:$0xff]
  %v156 = vld [vmem:[%s0 + $0x488] sm:$0xff]
  %v157 = vld [vmem:[%s0 + $0x490] sm:$0xff]
  %v158 = vld [vmem:[%s0 + $0x498] sm:$0xff]
  %v159 = vld [vmem:[%s0 + $0x4a0] sm:$0xff]
  %v160 = vld [vmem:[%s0 + $0x4a8] sm:$0xff]
  %v161 = vld [vmem:[%s0 + $0x4b0] sm:$0xff]
  %v162 = vld [vmem:[%s0 + $0x4b8] sm:$0xff]
  %v163 = vld [vmem:[%s0 + $0x4c0] sm:$0xff]
  %v164 = vld [vmem:[%s0 + $0x4c8] sm:$0xff]
  %v165 = vld [vmem:[%s0 + $0x4d0] sm:$0xff]
  %v166 = vld [vmem:[%s0 + $0x4d8] sm:$0xff]
  %v167 = vld [vmem:[%s0 + $0x4e0] sm:$0xff]
  %v168 = vld [vmem:[%s0 + $0x4e8] sm:$0xff]
  %v169 = vld [vmem:[%s0 + $0x4f0] sm:$0xff]
  %v170 = vld [vmem:[%s0 + $0x4f8] sm:$0xff]
  %v171 = vld [vmem:[%s0 + $0x500] sm:$0xff]
  %v172 = vld [vmem:[%s0 + $0x508] sm:$0xff]
  %v173 = vld [vmem:[%s0 + $0x510] sm:$0xff]
  %v174 = vld [vmem:[%s0 + $0x518] sm:$0xff]
  %v175 = vld [vmem:[%s0 + $0x520] sm:$0xff]
  %v176 = vld [vmem:[%s0 + $0x528] sm:$0xff]
  %v177 = vld [vmem:[%s0 + $0x530] sm:$0xff]
  %v178 = vld [vmem:[%s0 + $0x538] sm:$0xff]
  %v179 = vld [vmem:[%s0 + $0x540] sm:$0xff]
  %v180 = vld [vmem:[%s0 + $0x548] sm:$0xff]
  %v181 = vld [vmem:[%s0 + $0x550] sm:$0xff]
  %v182 = vld [vmem:[%s0 + $0x558] sm:$0xff]
  %v183 = vld [vmem:[%s0 + $0x560] sm:$0xff]
  %v184 = vld [vmem:[%s0 + $0x568] sm:$0xff]
  %v185 = vld [vmem:[%s0 + $0x570] sm:$0xff]
  %v186 = vld [vmem:[%s0 + $0x578] sm:$0xff]
  %v187 = vld [vmem:[%s0 + $0x580] sm:$0xff]
  %v188 = vld [vmem:[%s0 + $0x588] sm:$0xff]
  %v189 = vld [vmem:[%s0 + $0x590] sm:$0xff]
  %v190 = vld [vmem:[%s0 + $0x598] sm:$0xff]
  %v191 = vld [vmem:[%s0 + $0x5a0] sm:$0xff]
  %v192 = vld [vmem:[%s0 + $0x5a8] sm:$0xff]
  %v193 = vld [vmem:[%s0 + $0x5b0] sm:$0xff]
  %v194 = vld [vmem:[%s0 + $0x5b8] sm:$0xff]
  %v195 = vld [vmem:[%s0 + $0x5c0] sm:$0xff]
  %v196 = vld [vmem:[%s0 + $0x5c8] sm:$0xff]
  %v197 = vld [vmem:[%s0 + $0x5d0] sm:$0xff]
  %v198 = vld [vmem:[%s0 + $0x5d8] sm:$0xff]
  %v199 = vmax.f32 %v11, 0.0
  %v200 = vmax.f32 %v12, 0.0
  %v201 = vmax.f32 %v13, 0.0
  %v202 = vmax.f32 %v14, 0.0
  %v203 = vmax.f32 %v15, 0.0
  %v204 = vmax.f32 %v16, 0.0
  %v205 = vmax.f32 %v17, 0.0
  %v206 = vmax.f32 %v18, 0.0
  %v207 = vmax.f32 %v19, 0.0
  %v208 = vmax.f32 %v20, 0.0
  %v209 = vmax.f32 %v21, 0.0
  %v210 = vmax.f32 %v22, 0.0
  %v211 = vmax.f32 %v23, 0.0
  %v212 = vmax.f32 %v24, 0.0
  %v213 = vmax.f32 %v25, 0.0
  %v214 = vmax.f32 %v26, 0.0
  %v215 = vmax.f32 %v27, 0.0
  %v216 = vmax.f32 %v28, 0.0
  %v217 = vmax.f32 %v29, 0.0
  %v218 = vmax.f32 %v30, 0.0
  %v219 = vmax.f32 %v31, 0.0
  %v220 = vmax.f32 %v32, 0.0
  %v221 = vmax.f32 %v33, 0.0
  %v222 = vmax.f32 %v34, 0.0
  %v223 = vmax.f32 %v35, 0.0
  %v224 = vmax.f32 %v36, 0.0
  %v225 = vmax.f32 %v37, 0.0
  %v226 = vmax.f32 %v38, 0.0
  %v227 = vmax.f32 %v39, 0.0
  %v228 = vmax.f32 %v40, 0.0
  %v229 = vmax.f32 %v41, 0.0
  %v230 = vmax.f32 %v42, 0.0
  %v231 = vmax.f32 %v43, 0.0
  %v232 = vmax.f32 %v44, 0.0
  %v233 = vmax.f32 %v45, 0.0
  %v234 = vmax.f32 %v46, 0.0
  %v235 = vmax.f32 %v47, 0.0
  %v236 = vmax.f32 %v48, 0.0
  %v237 = vmax.f32 %v49, 0.0
  %v238 = vmax.f32 %v50, 0.0
  %v239 = vmax.f32 %v51, 0.0
  %v240 = vmax.f32 %v52, 0.0
  %v241 = vmax.f32 %v53, 0.0
  %v242 = vmax.f32 %v54, 0.0
  %v243 = vmax.f32 %v55, 0.0
  %v244 = vmax.f32 %v56, 0.0
  %v245 = vmax.f32 %v57, 0.0
  %v246 = vmax.f32 %v58, 0.0
  %v247 = vmax.f32 %v59, 0.0
  %v248 = vmax.f32 %v60, 0.0
  %v249 = vmax.f32 %v61, 0.0
  %v250 = vmax.f32 %v62, 0.0
  %v251 = vmax.f32 %v63, 0.0
  %v252 = vmax.f32 %v64, 0.0
  %v253 = vmax.f32 %v65, 0.0
  %v254 = vmax.f32 %v66, 0.0
  %v255 = vmax.f32 %v67, 0.0
  %v256 = vmax.f32 %v68, 0.0
  %v257 = vmax.f32 %v69, 0.0
  %v258 = vmax.f32 %v70, 0.0
  %v259 = vmax.f32 %v71, 0.0
  %v260 = vmax.f32 %v72, 0.0
  %v261 = vmax.f32 %v73, 0.0
  %v262 = vmax.f32 %v74, 0.0
  %v263 = vmax.f32 %v75, 0.0
  %v264 = vmax.f32 %v76, 0.0
  %v265 = vmax.f32 %v77, 0.0
  %v266 = vmax.f32 %v78, 0.0
  %v267 = vmax.f32 %v79, 0.0
  %v268 = vmax.f32 %v80, 0.0
  %v269 = vmax.f32 %v81, 0.0
  %v270 = vmax.f32 %v82, 0.0
  %v271 = vmax.f32 %v83, 0.0
  %v272 = vmax.f32 %v84, 0.0
  %v273 = vmax.f32 %v85, 0.0
  %v274 = vmax.f32 %v86, 0.0
  %v275 = vmax.f32 %v87, 0.0
  %v276 = vmax.f32 %v88, 0.0
  %v277 = vmax.f32 %v89, 0.0
  %v278 = vmax.f32 %v90, 0.0
  %v279 = vmax.f32 %v91, 0.0
  %v280 = vmax.f32 %v92, 0.0
  %v281 = vmax.f32 %v93, 0.0
  %v282 = vmax.f32 %v94, 0.0
  %v283 = vmax.f32 %v95, 0.0
  %v284 = vmax.f32 %v96, 0.0
  %v285 = vmax.f32 %v97, 0.0
  %v286 = vmax.f32 %v98, 0.0
  %v287 = vmax.f32 %v99, 0.0
  %v288 = vmax.f32 %v100, 0.0
  %v289 = vmax.f32 %v101, 0.0
  %v290 = vmax.f32 %v102, 0.0
  %v291 = vmax.f32 %v103, 0.0
  %v292 = vmax.f32 %v104, 0.0
  %v293 = vmax.f32 %v105, 0.0
  %v294 = vmax.f32 %v106, 0.0
  %v295 = vmax.f32 %v107, 0.0
  %v296 = vmax.f32 %v108, 0.0
  %v297 = vmax.f32 %v109, 0.0
  %v298 = vmax.f32 %v110, 0.0
  %v299 = vmax.f32 %v111, 0.0
  %v300 = vmax.f32 %v112, 0.0
  %v301 = vmax.f32 %v113, 0.0
  %v302 = vmax.f32 %v114, 0.0
  %v303 = vmax.f32 %v115, 0.0
  %v304 = vmax.f32 %v116, 0.0
  %v305 = vmax.f32 %v117, 0.0
  %v306 = vmax.f32 %v118, 0.0
  %v307 = vmax.f32 %v119, 0.0
  %v308 = vmax.f32 %v120, 0.0
  %v309 = vmax.f32 %v121, 0.0
  %v310 = vmax.f32 %v122, 0.0
  %v311 = vmax.f32 %v123, 0.0
  %v312 = vmax.f32 %v124, 0.0
  %v313 = vmax.f32 %v125, 0.0
  %v314 = vmax.f32 %v126, 0.0
  %v315 = vmax.f32 %v127, 0.0
  %v316 = vmax.f32 %v128, 0.0
  %v317 = vmax.f32 %v129, 0.0
  %v318 = vmax.f32 %v130, 0.0
  %v319 = vmax.f32 %v131, 0.0
  %v320 = vmax.f32 %v132, 0.0
  %v321 = vmax.f32 %v133, 0.0
  %v322 = vmax.f32 %v134, 0.0
  %v323 = vmax.f32 %v135, 0.0
  %v324 = vmax.f32 %v136, 0.0
  %v325 = vmax.f32 %v137, 0.0
  %v326 = vmax.f32 %v138, 0.0
  %v327 = vmax.f32 %v139, 0.0
  %v328 = vmax.f32 %v140, 0.0
  %v329 = vmax.f32 %v141, 0.0
  %v330 = vmax.f32 %v142, 0.0
  %v331 = vmax.f32 %v143, 0.0
  %v332 = vmax.f32 %v144, 0.0
  %v333 = vmax.f32 %v145, 0.0
  %v334 = vmax.f32 %v146, 0.0
  %v335 = vmax.f32 %v147, 0.0
  %v336 = vmax.f32 %v148, 0.0
  %v337 = vmax.f32 %v149, 0.0
  %v338 = vmax.f32 %v150, 0.0
  %v339 = vmax.f32 %v151, 0.0
  %v340 = vmax.f32 %v152, 0.0
  %v341 = vmax.f32 %v153, 0.0
  %v342 = vmax.f32 %v154, 0.0
  %v343 = vmax.f32 %v155, 0.0
  %v344 = vmax.f32 %v156, 0.0
  %v345 = vmax.f32 %v157, 0.0
  %v346 = vmax.f32 %v158, 0.0
  %v347 = vmax.f32 %v159, 0.0
  %v348 = vmax.f32 %v160, 0.0
  %v349 = vmax.f32 %v161, 0.0
  %v350 = vmax.f32 %v162, 0.0
  %v351 = vmax.f32 %v163, 0.0
  %v352 = vmax.f32 %v164, 0.0
  %v353 = vmax.f32 %v165, 0.0
  %v354 = vmax.f32 %v166, 0.0
  %v355 = vmax.f32 %v167, 0.0
  %v356 = vmax.f32 %v168, 0.0
  %v357 = vmax.f32 %v169, 0.0
  %v358 = vmax.f32 %v170, 0.0
  %v359 = vmax.f32 %v171, 0.0
  %v360 = vmax.f32 %v172, 0.0
  %v361 = vmax.f32 %v173, 0.0
  %v362 = vmax.f32 %v174, 0.0
  %v363 = vmax.f32 %v175, 0.0
  %v364 = vmax.f32 %v176, 0.0
  %v365 = vmax.f32 %v177, 0.0
  %v366 = vmax.f32 %v178, 0.0
  %v367 = vmax.f32 %v179, 0.0
  %v368 = vmax.f32 %v180, 0.0
  %v369 = vmax.f32 %v181, 0.0
  %v370 = vmax.f32 %v182, 0.0
  %v371 = vmax.f32 %v183, 0.0
  %v372 = vmax.f32 %v184, 0.0
  %v373 = vmax.f32 %v185, 0.0
  %v374 = vmax.f32 %v186, 0.0
  %v375 = vmax.f32 %v187, 0.0
  %v376 = vmax.f32 %v188, 0.0
  %v377 = vmax.f32 %v189, 0.0
  %v378 = vmax.f32 %v190, 0.0
  %v379 = vmax.f32 %v191, 0.0
  %v380 = vmax.f32 %v192, 0.0
  %v381 = vmax.f32 %v193, 0.0
  %v382 = vmax.f32 %v194, 0.0
  %v383 = vmax.f32 %v195, 0.0
  %v384 = vmax.f32 %v196, 0.0
  %v385 = vmax.f32 %v197, 0.0
  %v386 = vmax.f32 %v198, 0.0
  %v387 = vld [vmem:[%s1] sm:$0xff]
  %v388 = vld [vmem:[%s1 + $0x8] sm:$0xff]
  %v389 = vld [vmem:[%s1 + $0x10] sm:$0xff]
  %v390 = vld [vmem:[%s1 + $0x18] sm:$0xff]
  %v391 = vld [vmem:[%s1 + $0x20] sm:$0xff]
  %v392 = vld [vmem:[%s1 + $0x28] sm:$0xff]
  %v393 = vld [vmem:[%s1 + $0x30] sm:$0xff]
  %v394 = vld [vmem:[%s1 + $0x38] sm:$0xff]
  %v395 = vld [vmem:[%s1 + $0x40] sm:$0xff]
  %v396 = vld [vmem:[%s1 + $0x48] sm:$0xff]
  %v397 = vld [vmem:[%s1 + $0x50] sm:$0xff]
  %v398 = vld [vmem:[%s1 + $0x58] sm:$0xff]
  %v399 = vld [vmem:[%s1 + $0x60] sm:$0xff]
  %v400 = vld [vmem:[%s1 + $0x68] sm:$0xff]
  %v401 = vld [vmem:[%s1 + $0x70] sm:$0xff]
  %v402 = vld [vmem:[%s1 + $0x78] sm:$0xff]
  %v403 = vld [vmem:[%s1 + $0x80] sm:$0xff]
  %v404 = vld [vmem:[%s1 + $0x88] sm:$0xff]
  %v405 = vld [vmem:[%s1 + $0x90] sm:$0xff]
  %v406 = vld [vmem:[%s1 + $0x98] sm:$0xff]
  %v407 = vld [vmem:[%s1 + $0xa0] sm:$0xff]
  %v408 = vld [vmem:[%s1 + $0xa8] sm:$0xff]
  %v409 = vld [vmem:[%s1 + $0xb0] sm:$0xff]
  %v410 = vld [vmem:[%s1 + $0xb8] sm:$0xff]
  %v411 = vld [vmem:[%s1 + $0xc0] sm:$0xff]
  %v412 = vld [vmem:[%s1 + $0xc8] sm:$0xff]
  %v413 = vld [vmem:[%s1 + $0xd0] sm:$0xff]
  %v414 = vld [vmem:[%s1 + $0xd8] sm:$0xff]
  %v415 = vld [vmem:[%s1 + $0xe0] sm:$0xff]
  %v416 = vld [vmem:[%s1 + $0xe8] sm:$0xff]
  %v417 = vld [vmem:[%s1 + $0xf0] sm:$0xff]
  %v418 = vld [vmem:[%s1 + $0xf8] sm:$0xff]
  %v419 = vld [vmem:[%s1 + $0x100] sm:$0xff]
  %v420 = vld [vmem:[%s1 + $0x108] sm:$0xff]
  %v421 = vld [vmem:[%s1 + $0x110] sm:$0xff]
  %v422 = vld [vmem:[%s1 + $0x118] sm:$0xff]
  %v423 = vld [vmem:[%s1 + $0x120] sm:$0xff]
  %v424 = vld [vmem:[%s1 + $0x128] sm:$0xff]
  %v425 = vld [vmem:[%s1 + $0x130] sm:$0xff]
  %v426 = vld [vmem:[%s1 + $0x138] sm:$0xff]
  %v427 = vld [vmem:[%s1 + $0x140] sm:$0xff]
  %v428 = vld [vmem:[%s1 + $0x148] sm:$0xff]
  %v429 = vld [vmem:[%s1 + $0x150] sm:$0xff]
  %v430 = vld [vmem:[%s1 + $0x158] sm:$0xff]
  %v431 = vld [vmem:[%s1 + $0x160] sm:$0xff]
  %v432 = vld [vmem:[%s1 + $0x168] sm:$0xff]
  %v433 = vld [vmem:[%s1 + $0x170] sm:$0xff]
  %v434 = vld [vmem:[%s1 + $0x178] sm:$0xff]
  %v435 = vld [vmem:[%s1 + $0x180] sm:$0xff]
  %v436 = vld [vmem:[%s1 + $0x188] sm:$0xff]
  %v437 = vld [vmem:[%s1 + $0x190] sm:$0xff]
  %v438 = vld [vmem:[%s1 + $0x198] sm:$0xff]
  %v439 = vld [vmem:[%s1 + $0x1a0] sm:$0xff]
  %v440 = vld [vmem:[%s1 + $0x1a8] sm:$0xff]
  %v441 = vld [vmem:[%s1 + $0x1b0] sm:$0xff]
  %v442 = vld [vmem:[%s1 + $0x1b8] sm:$0xff]
  %v443 = vld [vmem:[%s1 + $0x1c0] sm:$0xff]
  %v444 = vld [vmem:[%s1 + $0x1c8] sm:$0xff]
  %v445 = vld [vmem:[%s1 + $0x1d0] sm:$0xff]
  %v446 = vld [vmem:[%s1 + $0x1d8] sm:$0xff]
  %v447 = vld [vmem:[%s1 + $0x1e0] sm:$0xff]
  %v448 = vld [vmem:[%s1 + $0x1e8] sm:$0xff]
  %v449 = vld [vmem:[%s1 + $0x1f0] sm:$0xff]
  %v450 = vld [vmem:[%s1 + $0x1f8] sm:$0xff]
  %v451 = vld [vmem:[%s1 + $0x200] sm:$0xff]
  %v452 = vld [vmem:[%s1 + $0x208] sm:$0xff]
  %v453 = vld [vmem:[%s1 + $0x210] sm:$0xff]
  %v454 = vld [vmem:[%s1 + $0x218] sm:$0xff]
  %v455 = vld [vmem:[%s1 + $0x220] sm:$0xff]
  %v456 = vld [vmem:[%s1 + $0x228] sm:$0xff]
  %v457 = vld [vmem:[%s1 + $0x230] sm:$0xff]
  %v458 = vld [vmem:[%s1 + $0x238] sm:$0xff]
  %v459 = vld [vmem:[%s1 + $0x240] sm:$0xff]
  %v460 = vld [vmem:[%s1 + $0x248] sm:$0xff]
  %v461 = vld [vmem:[%s1 + $0x250] sm:$0xff]
  %v462 = vld [vmem:[%s1 + $0x258] sm:$0xff]
  %v463 = vld [vmem:[%s1 + $0x260] sm:$0xff]
  %v464 = vld [vmem:[%s1 + $0x268] sm:$0xff]
  %v465 = vld [vmem:[%s1 + $0x270] sm:$0xff]
  %v466 = vld [vmem:[%s1 + $0x278] sm:$0xff]
  %v467 = vld [vmem:[%s1 + $0x280] sm:$0xff]
  %v468 = vld [vmem:[%s1 + $0x288] sm:$0xff]
  %v469 = vld [vmem:[%s1 + $0x290] sm:$0xff]
  %v470 = vld [vmem:[%s1 + $0x298] sm:$0xff]
  %v471 = vld [vmem:[%s1 + $0x2a0] sm:$0xff]
  %v472 = vld [vmem:[%s1 + $0x2a8] sm:$0xff]
  %v473 = vld [vmem:[%s1 + $0x2b0] sm:$0xff]
  %v474 = vld [vmem:[%s1 + $0x2b8] sm:$0xff]
  %v475 = vld [vmem:[%s1 + $0x2c0] sm:$0xff]
  %v476 = vld [vmem:[%s1 + $0x2c8] sm:$0xff]
  %v477 = vld [vmem:[%s1 + $0x2d0] sm:$0xff]
  %v478 = vld [vmem:[%s1 + $0x2d8] sm:$0xff]
  %v479 = vld [vmem:[%s1 + $0x2e0] sm:$0xff]
  %v480 = vld [vmem:[%s1 + $0x2e8] sm:$0xff]
  %v481 = vld [vmem:[%s1 + $0x2f0] sm:$0xff]
  %v482 = vld [vmem:[%s1 + $0x2f8] sm:$0xff]
  %v483 = vld [vmem:[%s1 + $0x300] sm:$0xff]
  %v484 = vld [vmem:[%s1 + $0x308] sm:$0xff]
  %v485 = vld [vmem:[%s1 + $0x310] sm:$0xff]
  %v486 = vld [vmem:[%s1 + $0x318] sm:$0xff]
  %v487 = vld [vmem:[%s1 + $0x320] sm:$0xff]
  %v488 = vld [vmem:[%s1 + $0x328] sm:$0xff]
  %v489 = vld [vmem:[%s1 + $0x330] sm:$0xff]
  %v490 = vld [vmem:[%s1 + $0x338] sm:$0xff]
  %v491 = vld [vmem:[%s1 + $0x340] sm:$0xff]
  %v492 = vld [vmem:[%s1 + $0x348] sm:$0xff]
  %v493 = vld [vmem:[%s1 + $0x350] sm:$0xff]
  %v494 = vld [vmem:[%s1 + $0x358] sm:$0xff]
  %v495 = vld [vmem:[%s1 + $0x360] sm:$0xff]
  %v496 = vld [vmem:[%s1 + $0x368] sm:$0xff]
  %v497 = vld [vmem:[%s1 + $0x370] sm:$0xff]
  %v498 = vld [vmem:[%s1 + $0x378] sm:$0xff]
  %v499 = vld [vmem:[%s1 + $0x380] sm:$0xff]
  %v500 = vld [vmem:[%s1 + $0x388] sm:$0xff]
  %v501 = vld [vmem:[%s1 + $0x390] sm:$0xff]
  %v502 = vld [vmem:[%s1 + $0x398] sm:$0xff]
  %v503 = vld [vmem:[%s1 + $0x3a0] sm:$0xff]
  %v504 = vld [vmem:[%s1 + $0x3a8] sm:$0xff]
  %v505 = vld [vmem:[%s1 + $0x3b0] sm:$0xff]
  %v506 = vld [vmem:[%s1 + $0x3b8] sm:$0xff]
  %v507 = vld [vmem:[%s1 + $0x3c0] sm:$0xff]
  %v508 = vld [vmem:[%s1 + $0x3c8] sm:$0xff]
  %v509 = vld [vmem:[%s1 + $0x3d0] sm:$0xff]
  %v510 = vld [vmem:[%s1 + $0x3d8] sm:$0xff]
  %v511 = vld [vmem:[%s1 + $0x3e0] sm:$0xff]
  %v512 = vld [vmem:[%s1 + $0x3e8] sm:$0xff]
  %v513 = vld [vmem:[%s1 + $0x3f0] sm:$0xff]
  %v514 = vld [vmem:[%s1 + $0x3f8] sm:$0xff]
  %v515 = vld [vmem:[%s1 + $0x400] sm:$0xff]
  %v516 = vld [vmem:[%s1 + $0x408] sm:$0xff]
  %v517 = vld [vmem:[%s1 + $0x410] sm:$0xff]
  %v518 = vld [vmem:[%s1 + $0x418] sm:$0xff]
  %v519 = vld [vmem:[%s1 + $0x420] sm:$0xff]
  %v520 = vld [vmem:[%s1 + $0x428] sm:$0xff]
  %v521 = vld [vmem:[%s1 + $0x430] sm:$0xff]
  %v522 = vld [vmem:[%s1 + $0x438] sm:$0xff]
  %v523 = vld [vmem:[%s1 + $0x440] sm:$0xff]
  %v524 = vld [vmem:[%s1 + $0x448] sm:$0xff]
  %v525 = vld [vmem:[%s1 + $0x450] sm:$0xff]
  %v526 = vld [vmem:[%s1 + $0x458] sm:$0xff]
  %v527 = vld [vmem:[%s1 + $0x460] sm:$0xff]
  %v528 = vld [vmem:[%s1 + $0x468] sm:$0xff]
  %v529 = vld [vmem:[%s1 + $0x470] sm:$0xff]
  %v530 = vld [vmem:[%s1 + $0x478] sm:$0xff]
  %v531 = vld [vmem:[%s1 + $0x480] sm:$0xff]
  %v532 = vld [vmem:[%s1 + $0x488] sm:$0xff]
  %v533 = vld [vmem:[%s1 + $0x490] sm:$0xff]
  %v534 = vld [vmem:[%s1 + $0x498] sm:$0xff]
  %v535 = vld [vmem:[%s1 + $0x4a0] sm:$0xff]
  %v536 = vld [vmem:[%s1 + $0x4a8] sm:$0xff]
  %v537 = vld [vmem:[%s1 + $0x4b0] sm:$0xff]
  %v538 = vld [vmem:[%s1 + $0x4b8] sm:$0xff]
  %v539 = vld [vmem:[%s1 + $0x4c0] sm:$0xff]
  %v540 = vld [vmem:[%s1 + $0x4c8] sm:$0xff]
  %v541 = vld [vmem:[%s1 + $0x4d0] sm:$0xff]
  %v542 = vld [vmem:[%s1 + $0x4d8] sm:$0xff]
  %v543 = vld [vmem:[%s1 + $0x4e0] sm:$0xff]
  %v544 = vld [vmem:[%s1 + $0x4e8] sm:$0xff]
  %v545 = vld [vmem:[%s1 + $0x4f0] sm:$0xff]
  %v546 = vld [vmem:[%s1 + $0x4f8] sm:$0xff]
  %v547 = vld [vmem:[%s1 + $0x500] sm:$0xff]
  %v548 = vld [vmem:[%s1 + $0x508] sm:$0xff]
  %v549 = vld [vmem:[%s1 + $0x510] sm:$0xff]
  %v550 = vld [vmem:[%s1 + $0x518] sm:$0xff]
  %v551 = vld [vmem:[%s1 + $0x520] sm:$0xff]
  %v552 = vld [vmem:[%s1 + $0x528] sm:$0xff]
  %v553 = vld [vmem:[%s1 + $0x530] sm:$0xff]
  %v554 = vld [vmem:[%s1 + $0x538] sm:$0xff]
  %v555 = vld [vmem:[%s1 + $0x540] sm:$0xff]
  %v556 = vld [vmem:[%s1 + $0x548] sm:$0xff]
  %v557 = vld [vmem:[%s1 + $0x550] sm:$0xff]
  %v558 = vld [vmem:[%s1 + $0x558] sm:$0xff]
  %v559 = vld [vmem:[%s1 + $0x560] sm:$0xff]
  %v560 = vld [vmem:[%s1 + $0x568] sm:$0xff]
  %v561 = vld [vmem:[%s1 + $0x570] sm:$0xff]
  %v562 = vld [vmem:[%s1 + $0x578] sm:$0xff]
  %v563 = vld [vmem:[%s1 + $0x580] sm:$0xff]
  %v564 = vld [vmem:[%s1 + $0x588] sm:$0xff]
  %v565 = vld [vmem:[%s1 + $0x590] sm:$0xff]
  %v566 = vld [vmem:[%s1 + $0x598] sm:$0xff]
  %v567 = vld [vmem:[%s1 + $0x5a0] sm:$0xff]
  %v568 = vld [vmem:[%s1 + $0x5a8] sm:$0xff]
  %v569 = vld [vmem:[%s1 + $0x5b0] sm:$0xff]
  %v570 = vld [vmem:[%s1 + $0x5b8] sm:$0xff]
  %v571 = vld [vmem:[%s1 + $0x5c0] sm:$0xff]
  %v572 = vld [vmem:[%s1 + $0x5c8] sm:$0xff]
  %v573 = vld [vmem:[%s1 + $0x5d0] sm:$0xff]
  %v574 = vld [vmem:[%s1 + $0x5d8] sm:$0xff]
  %v575 = vld [vmem:[%s1 + $0x5e0] sm:$0xff]
  %v576 = vld [vmem:[%s1 + $0x5e8] sm:$0xff]
  %v577 = vld [vmem:[%s1 + $0x5f0] sm:$0xff]
  %v578 = vld [vmem:[%s1 + $0x5f8] sm:$0xff]
  %vm579 = vcmask 785408
  %v581 = vsel %vm579, %v398, 0
  %v584 = vsel %vm579, %v410, 0
  %v587 = vsel %vm579, %v422, 0
  %v590 = vsel %vm579, %v434, 0
  %v593 = vsel %vm579, %v446, 0
  %v596 = vsel %vm579, %v458, 0
  %v599 = vsel %vm579, %v470, 0
  %v602 = vsel %vm579, %v482, 0
  %v605 = vsel %vm579, %v494, 0
  %v608 = vsel %vm579, %v506, 0
  %v611 = vsel %vm579, %v518, 0
  %v614 = vsel %vm579, %v530, 0
  %v617 = vsel %vm579, %v542, 0
  %v620 = vsel %vm579, %v554, 0
  %v623 = vsel %vm579, %v566, 0
  %v626 = vsel %vm579, %v578, 0
  %628 = vmatprep.subr.mxu0 0.0
  %629 = vmatpush1.msra.mxu0 %v199
  %630 = vmatprep.subr.mxu0 0.0
  %631 = vmatpush1.msra.mxu0 %v200
  %632 = vmatprep.subr.mxu0 0.0
  %633 = vmatpush1.msra.mxu0 %v201
  %634 = vmatprep.subr.mxu0 0.0
  %635 = vmatpush1.msra.mxu0 %v202
  %636 = vmatprep.subr.mxu0 0.0
  %637 = vmatpush1.msra.mxu0 %v203
  %638 = vmatprep.subr.mxu0 0.0
  %639 = vmatpush1.msra.mxu0 %v204
  %640 = vmatprep.subr.mxu0 0.0
  %641 = vmatpush1.msra.mxu0 %v205
  %642 = vmatprep.subr.mxu0 0.0
  %643 = vmatpush1.msra.mxu0 %v206
  %644 = vmatprep.subr.mxu0 0.0
  %645 = vmatpush1.msra.mxu0 %v207
  %646 = vmatprep.subr.mxu0 0.0
  %647 = vmatpush1.msra.mxu0 %v208
  %648 = vmatprep.subr.mxu0 0.0
  %649 = vmatpush1.msra.mxu0 %v209
  %650 = vmatprep.subr.mxu0 0.0
  %651 = vmatpush1.msra.mxu0 %v210
  %652 = vmatprep.subr.mxu0 0.0
  %653 = vmatpush1.msra.mxu0 %v211
  %654 = vmatprep.subr.mxu0 0.0
  %655 = vmatpush1.msra.mxu0 %v212
  %656 = vmatprep.subr.mxu0 0.0
  %657 = vmatpush1.msra.mxu0 %v213
  %658 = vmatprep.subr.mxu0 0.0
  %659 = vmatpush1.msra.mxu0 %v214
  %660 = vmatprep.subr.mxu0 0.0
  %661 = vmatpush1.msra.mxu0 %v215
  %662 = vmatprep.subr.mxu0 0.0
  %663 = vmatpush1.msra.mxu0 %v216
  %664 = vmatprep.subr.mxu0 0.0
  %665 = vmatpush1.msra.mxu0 %v217
  %666 = vmatprep.subr.mxu0 0.0
  %667 = vmatpush1.msra.mxu0 %v218
  %668 = vmatprep.subr.mxu0 0.0
  %669 = vmatpush1.msra.mxu0 %v219
  %670 = vmatprep.subr.mxu0 0.0
  %671 = vmatpush1.msra.mxu0 %v220
  %672 = vmatprep.subr.mxu0 0.0
  %673 = vmatpush1.msra.mxu0 %v221
  %674 = vmatprep.subr.mxu0 0.0
  %675 = vmatpush1.msra.mxu0 %v222
  %676 = vmatprep.subr.mxu0 0.0
  %677 = vmatpush1.msra.mxu0 %v223
  %678 = vmatprep.subr.mxu0 0.0
  %679 = vmatpush1.msra.mxu0 %v224
  %680 = vmatprep.subr.mxu0 0.0
  %681 = vmatpush1.msra.mxu0 %v225
  %682 = vmatprep.subr.mxu0 0.0
  %683 = vmatpush1.msra.mxu0 %v226
  %684 = vmatprep.subr.mxu0 0.0
  %685 = vmatpush1.msra.mxu0 %v227
  %686 = vmatprep.subr.mxu0 0.0
  %687 = vmatpush1.msra.mxu0 %v228
  %688 = vmatprep.subr.mxu0 0.0
  %689 = vmatpush1.msra.mxu0 %v229
  %690 = vmatprep.subr.mxu0 0.0
  %691 = vmatpush1.msra.mxu0 %v230
  %692 = vmatprep.mubr.f32.mxu0 %v388
  %693 = vmatmul.mubr.f32.gmra.mrb[0].mxu0 %v387
  %v694 = vpop.f32.mrb[0].mxu0
  %v695 = vadd.f32 0.0, %v694
  %v696 = vpop.f32.mrb[0].mxu0
  %697 = vmatprep.mubr.f32.mxu0 %v400
  %698 = vmatmul.mubr.f32.gmra.mrb[0].mxu0 %v399
  %v699 = vpop.f32.mrb[0].mxu0
  %v700 = vadd.f32 0.0, %v699
  %v701 = vpop.f32.mrb[0].mxu0
  %702 = vmatprep.mubr.f32.mxu0 %v412
  %703 = vmatmul.mubr.f32.gmra.mrb[0].mxu0 %v411
  %v704 = vpop.f32.mrb[0].mxu0
  %v705 = vadd.f32 0.0, %v704
  %v706 = vpop.f32.mrb[0].mxu0
  %707 = vmatprep.mubr.f32.mxu0 %v424
  %708 = vmatmul.mubr.f32.gmra.mrb[0].mxu0 %v423
  %v709 = vpop.f32.mrb[0].mxu0
  %v710 = vadd.f32 0.0, %v709
  %v711 = vpop.f32.mrb[0].mxu0
  %712 = vmatprep.mubr.f32.mxu0 %v436
  %713 = vmatmul.mubr.f32.gmra.mrb[0].mxu0 %v435
  %v714 = vpop.f32.mrb[0].mxu0
  %v715 = vadd.f32 0.0, %v714
  %v716 = vpop.f32.mrb[0].mxu0
  %717 = vmatprep.mubr.f32.mxu0 %v448
  %718 = vmatmul.mubr.f32.gmra.mrb[0].mxu0 %v447
  %v719 = vpop.f32.mrb[0].mxu0
  %v720 = vadd.f32 0.0, %v719
  %v721 = vpop.f32.mrb[0].mxu0
  %722 = vmatprep.mubr.f32.mxu0 %v460
  %723 = vmatmul.mubr.f32.gmra.mrb[0].mxu0 %v459
  %v724 = vpop.f32.mrb[0].mxu0
  %v725 = vadd.f32 0.0, %v724
  %v726 = vpop.f32.mrb[0].mxu0
  %727 = vmatprep.mubr.f32.mxu0 %v472
  %728 = vmatmul.mubr.f32.gmra.mrb[0].mxu0 %v471
  %v729 = vpop.f32.mrb[0].mxu0
  %v730 = vadd.f32 0.0, %v729
  %v731 = vpop.f32.mrb[0].mxu0
  %732 = vmatprep.mubr.f32.mxu0 %v484
  %733 = vmatmul.mubr.f32.gmra.mrb[0].mxu0 %v483
  %v734 = vpop.f32.mrb[0].mxu0
  %v735 = vadd.f32 0.0, %v734
  %v736 = vpop.f32.mrb[0].mxu0
  %737 = vmatprep.mubr.f32.mxu0 %v496
  %738 = vmatmul.mubr.f32.gmra.mrb[0].mxu0 %v495
  %v739 = vpop.f32.mrb[0].mxu0
  %v740 = vadd.f32 0.0, %v739
  %v741 = vpop.f32.mrb[0].mxu0
  %742 = vmatprep.mubr.f32.mxu0 %v508
  %743 = vmatmul.mubr.f32.gmra.mrb[0].mxu0 %v507
  %v744 = vpop.f32.mrb[0].mxu0
  %v745 = vadd.f32 0.0, %v744
  %v746 = vpop.f32.mrb[0].mxu0
  %747 = vmatprep.mubr.f32.mxu0 %v520
  %748 = vmatmul.mubr.f32.gmra.mrb[0].mxu0 %v519
  %v749 = vpop.f32.mrb[0].mxu0
  %v750 = vadd.f32 0.0, %v749
  %v751 = vpop.f32.mrb[0].mxu0
  %752 = vmatprep.mubr.f32.mxu0 %v532
  %753 = vmatmul.mubr.f32.gmra.mrb[0].mxu0 %v531
  %v754 = vpop.f32.mrb[0].mxu0
  %v755 = vadd.f32 0.0, %v754
  %v756 = vpop.f32.mrb[0].mxu0
  %757 = vmatprep.mubr.f32.mxu0 %v544
  %758 = vmatmul.mubr.f32.gmra.mrb[0].mxu0 %v543
  %v759 = vpop.f32.mrb[0].mxu0
  %v760 = vadd.f32 0.0, %v759
  %v761 = vpop.f32.mrb[0].mxu0
  %762 = vmatprep.mubr.f32.mxu0 %v556
  %763 = vmatmul.mubr.f32.gmra.mrb[0].mxu0 %v555
  %v764 = vpop.f32.mrb[0].mxu0
  %v765 = vadd.f32 0.0, %v764
  %v766 = vpop.f32.mrb[0].mxu0
  %767 = vmatprep.mubr.f32.mxu0 %v568
  %768 = vmatmul.mubr.f32.gmra.mrb[0].mxu0 %v567
  %v769 = vpop.f32.mrb[0].mxu0
  %v770 = vadd.f32 0.0, %v769
  %v771 = vpop.f32.mrb[0].mxu0
  %772 = vdwg.mxu0
  %773 = vmatprep.subr.mxu0 0.0
  %774 = vmatpush1.msra.mxu0 %v231
  %775 = vmatprep.subr.mxu0 0.0
  %776 = vmatpush1.msra.mxu0 %v232
  %777 = vmatprep.subr.mxu0 0.0
  %778 = vmatpush1.msra.mxu0 %v233
  %779 = vmatprep.subr.mxu0 0.0
  %780 = vmatpush1.msra.mxu0 %v234
  %781 = vmatprep.subr.mxu0 0.0
  %782 = vmatpush1.msra.mxu0 %v235
  %783 = vmatprep.subr.mxu0 0.0
  %784 = vmatpush1.msra.mxu0 %v236
  %785 = vmatprep.subr.mxu0 0.0
  %786 = vmatpush1.msra.mxu0 %v237
  %787 = vmatprep.subr.mxu0 0.0
  %788 = vmatpush1.msra.mxu0 %v238
  %789 = vmatprep.subr.mxu0 0.0
  %790 = vmatpush1.msra.mxu0 %v239
  %791 = vmatprep.subr.mxu0 0.0
  %792 = vmatpush1.msra.mxu0 %v240
  %793 = vmatprep.subr.mxu0 0.0
  %794 = vmatpush1.msra.mxu0 %v241
  %795 = vmatprep.subr.mxu0 0.0
  %796 = vmatpush1.msra.mxu0 %v242
  %797 = vmatprep.subr.mxu0 0.0
  %798 = vmatpush1.msra.mxu0 %v243
  %799 = vmatprep.subr.mxu0 0.0
  %800 = vmatpush1.msra.mxu0 %v244
  %801 = vmatprep.subr.mxu0 0.0
  %802 = vmatpush1.msra.mxu0 %v245
  %803 = vmatprep.subr.mxu0 0.0
  %804 = vmatpush1.msra.mxu0 %v246
  %805 = vmatprep.subr.mxu0 0.0
  %806 = vmatpush1.msra.mxu0 %v247
  %807 = vmatprep.subr.mxu0 0.0
  %808 = vmatpush1.msra.mxu0 %v248
  %809 = vmatprep.subr.mxu0 0.0
  %810 = vmatpush1.msra.mxu0 %v249
  %811 = vmatprep.subr.mxu0 0.0
  %812 = vmatpush1.msra.mxu0 %v250
  %813 = vmatprep.subr.mxu0 0.0
  %814 = vmatpush1.msra.mxu0 %v251
  %815 = vmatprep.subr.mxu0 0.0
  %816 = vmatpush1.msra.mxu0 %v252
  %817 = vmatprep.subr.mxu0 0.0
  %818 = vmatpush1.msra.mxu0 %v253
  %819 = vmatprep.subr.mxu0 0.0
  %820 = vmatpush1.msra.mxu0 %v254
  %821 = vmatprep.subr.mxu0 0.0
  %822 = vmatpush1.msra.mxu0 %v255
  %823 = vmatprep.subr.mxu0 0.0
  %824 = vmatpush1.msra.mxu0 %v256
  %825 = vmatprep.subr.mxu0 0.0
  %826 = vmatpush1.msra.mxu0 %v257
  %827 = vmatprep.subr.mxu0 0.0
  %828 = vmatpush1.msra.mxu0 %v258
  %829 = vmatprep.subr.mxu0 0.0
  %830 = vmatpush1.msra.mxu0 %v259
  %831 = vmatprep.subr.mxu0 0.0
  %832 = vmatpush1.msra.mxu0 %v260
  %833 = vmatprep.subr.mxu0 0.0
  %834 = vmatpush1.msra.mxu0 %v261
  %835 = vmatprep.subr.mxu0 0.0
  %836 = vmatpush1.msra.mxu0 %v262
  %837 = vmatprep.mubr.f32.mxu0 %v390
  %838 = vmatmul.mubr.f32.gmra.mrb[0].mxu0 %v389
  %v839 = vpop.f32.mrb[0].mxu0
  %v840 = vadd.f32 %v695, %v839
  %v841 = vpop.f32.mrb[0].mxu0
  %842 = vmatprep.mubr.f32.mxu0 %v402
  %843 = vmatmul.mubr.f32.gmra.mrb[0].mxu0 %v401
  %v844 = vpop.f32.mrb[0].mxu0
  %v845 = vadd.f32 %v700, %v844
  %v846 = vpop.f32.mrb[0].mxu0
  %847 = vmatprep.mubr.f32.mxu0 %v414
  %848 = vmatmul.mubr.f32.gmra.mrb[0].mxu0 %v413
  %v849 = vpop.f32.mrb[0].mxu0
  %v850 = vadd.f32 %v705, %v849
  %v851 = vpop.f32.mrb[0].mxu0
  %852 = vmatprep.mubr.f32.mxu0 %v426
  %853 = vmatmul.mubr.f32.gmra.mrb[0].mxu0 %v425
  %v854 = vpop.f32.mrb[0].mxu0
  %v855 = vadd.f32 %v710, %v854
  %v856 = vpop.f32.mrb[0].mxu0
  %857 = vmatprep.mubr.f32.mxu0 %v438
  %858 = vmatmul.mubr.f32.gmra.mrb[0].mxu0 %v437
  %v859 = vpop.f32.mrb[0].mxu0
  %v860 = vadd.f32 %v715, %v859
  %v861 = vpop.f32.mrb[0].mxu0
  %862 = vmatprep.mubr.f32.mxu0 %v450
  %863 = vmatmul.mubr.f32.gmra.mrb[0].mxu0 %v449
  %v864 = vpop.f32.mrb[0].mxu0
  %v865 = vadd.f32 %v720, %v864
  %v866 = vpop.f32.mrb[0].mxu0
  %867 = vmatprep.mubr.f32.mxu0 %v462
  %868 = vmatmul.mubr.f32.gmra.mrb[0].mxu0 %v461
  %v869 = vpop.f32.mrb[0].mxu0
  %v870 = vadd.f32 %v725, %v869
  %v871 = vpop.f32.mrb[0].mxu0
  %872 = vmatprep.mubr.f32.mxu0 %v474
  %873 = vmatmul.mubr.f32.gmra.mrb[0].mxu0 %v473
  %v874 = vpop.f32.mrb[0].mxu0
  %v875 = vadd.f32 %v730, %v874
  %v876 = vpop.f32.mrb[0].mxu0
  %877 = vmatprep.mubr.f32.mxu0 %v486
  %878 = vmatmul.mubr.f32.gmra.mrb[0].mxu0 %v485
  %v879 = vpop.f32.mrb[0].mxu0
  %v880 = vadd.f32 %v735, %v879
  %v881 = vpop.f32.mrb[0].mxu0
  %882 = vmatprep.mubr.f32.mxu0 %v498
  %883 = vmatmul.mubr.f32.gmra.mrb[0].mxu0 %v497
  %v884 = vpop.f32.mrb[0].mxu0
  %v885 = vadd.f32 %v740, %v884
  %v886 = vpop.f32.mrb[0].mxu0
  %887 = vmatprep.mubr.f32.mxu0 %v510
  %888 = vmatmul.mubr.f32.gmra.mrb[0].mxu0 %v509
  %v889 = vpop.f32.mrb[0].mxu0
  %v890 = vadd.f32 %v745, %v889
  %v891 = vpop.f32.mrb[0].mxu0
  %892 = vmatprep.mubr.f32.mxu0 %v522
  %893 = vmatmul.mubr.f32.gmra.mrb[0].mxu0 %v521
  %v894 = vpop.f32.mrb[0].mxu0
  %v895 = vadd.f32 %v750, %v894
  %v896 = vpop.f32.mrb[0].mxu0
  %897 = vmatprep.mubr.f32.mxu0 %v534
  %898 = vmatmul.mubr.f32.gmra.mrb[0].mxu0 %v533
  %v899 = vpop.f32.mrb[0].mxu0
  %v900 = vadd.f32 %v755, %v899
  %v901 = vpop.f32.mrb[0].mxu0
  %902 = vmatprep.mubr.f32.mxu0 %v546
  %903 = vmatmul.mubr.f32.gmra.mrb[0].mxu0 %v545
  %v904 = vpop.f32.mrb[0].mxu0
  %v905 = vadd.f32 %v760, %v904
  %v906 = vpop.f32.mrb[0].mxu0
  %907 = vmatprep.mubr.f32.mxu0 %v558
  %908 = vmatmul.mubr.f32.gmra.mrb[0].mxu0 %v557
  %v909 = vpop.f32.mrb[0].mxu0
  %v910 = vadd.f32 %v765, %v909
  %v911 = vpop.f32.mrb[0].mxu0
  %912 = vmatprep.mubr.f32.mxu0 %v570
  %913 = vmatmul.mubr.f32.gmra.mrb[0].mxu0 %v569
  %v914 = vpop.f32.mrb[0].mxu0
  %v915 = vadd.f32 %v770, %v914
  %v916 = vpop.f32.mrb[0].mxu0
  %917 = vdwg.mxu0
  %918 = vmatprep.subr.mxu0 0.0
  %919 = vmatpush1.msra.mxu0 %v263
  %920 = vmatprep.subr.mxu0 0.0
  %921 = vmatpush1.msra.mxu0 %v264
  %922 = vmatprep.subr.mxu0 0.0
  %923 = vmatpush1.msra.mxu0 %v265
  %924 = vmatprep.subr.mxu0 0.0
  %925 = vmatpush1.msra.mxu0 %v266
  %926 = vmatprep.subr.mxu0 0.0
  %927 = vmatpush1.msra.mxu0 %v267
  %928 = vmatprep.subr.mxu0 0.0
  %929 = vmatpush1.msra.mxu0 %v268
  %930 = vmatprep.subr.mxu0 0.0
  %931 = vmatpush1.msra.mxu0 %v269
  %932 = vmatprep.subr.mxu0 0.0
  %933 = vmatpush1.msra.mxu0 %v270
  %934 = vmatprep.subr.mxu0 0.0
  %935 = vmatpush1.msra.mxu0 %v271
  %936 = vmatprep.subr.mxu0 0.0
  %937 = vmatpush1.msra.mxu0 %v272
  %938 = vmatprep.subr.mxu0 0.0
  %939 = vmatpush1.msra.mxu0 %v273
  %940 = vmatprep.subr.mxu0 0.0
  %941 = vmatpush1.msra.mxu0 %v274
  %942 = vmatprep.subr.mxu0 0.0
  %943 = vmatpush1.msra.mxu0 %v275
  %944 = vmatprep.subr.mxu0 0.0
  %945 = vmatpush1.msra.mxu0 %v276
  %946 = vmatprep.subr.mxu0 0.0
  %947 = vmatpush1.msra.mxu0 %v277
  %948 = vmatprep.subr.mxu0 0.0
  %949 = vmatpush1.msra.mxu0 %v278
  %950 = vmatprep.subr.mxu0 0.0
  %951 = vmatpush1.msra.mxu0 %v279
  %952 = vmatprep.subr.mxu0 0.0
  %953 = vmatpush1.msra.mxu0 %v280
  %954 = vmatprep.subr.mxu0 0.0
  %955 = vmatpush1.msra.mxu0 %v281
  %956 = vmatprep.subr.mxu0 0.0
  %957 = vmatpush1.msra.mxu0 %v282
  %958 = vmatprep.subr.mxu0 0.0
  %959 = vmatpush1.msra.mxu0 %v283
  %960 = vmatprep.subr.mxu0 0.0
  %961 = vmatpush1.msra.mxu0 %v284
  %962 = vmatprep.subr.mxu0 0.0
  %963 = vmatpush1.msra.mxu0 %v285
  %964 = vmatprep.subr.mxu0 0.0
  %965 = vmatpush1.msra.mxu0 %v286
  %966 = vmatprep.subr.mxu0 0.0
  %967 = vmatpush1.msra.mxu0 %v287
  %968 = vmatprep.subr.mxu0 0.0
  %969 = vmatpush1.msra.mxu0 %v288
  %970 = vmatprep.subr.mxu0 0.0
  %971 = vmatpush1.msra.mxu0 %v289
  %972 = vmatprep.subr.mxu0 0.0
  %973 = vmatpush1.msra.mxu0 %v290
  %974 = vmatprep.subr.mxu0 0.0
  %975 = vmatpush1.msra.mxu0 %v291
  %976 = vmatprep.subr.mxu0 0.0
  %977 = vmatpush1.msra.mxu0 %v292
  %978 = vmatprep.subr.mxu0 0.0
  %979 = vmatpush1.msra.mxu0 %v293
  %980 = vmatprep.subr.mxu0 0.0
  %981 = vmatpush1.msra.mxu0 %v294
  %982 = vmatprep.mubr.f32.mxu0 %v392
  %983 = vmatmul.mubr.f32.gmra.mrb[0].mxu0 %v391
  %v984 = vpop.f32.mrb[0].mxu0
  %v985 = vadd.f32 %v840, %v984
  %v986 = vpop.f32.mrb[0].mxu0
  %987 = vmatprep.mubr.f32.mxu0 %v404
  %988 = vmatmul.mubr.f32.gmra.mrb[0].mxu0 %v403
  %v989 = vpop.f32.mrb[0].mxu0
  %v990 = vadd.f32 %v845, %v989
  %v991 = vpop.f32.mrb[0].mxu0
  %992 = vmatprep.mubr.f32.mxu0 %v416
  %993 = vmatmul.mubr.f32.gmra.mrb[0].mxu0 %v415
  %v994 = vpop.f32.mrb[0].mxu0
  %v995 = vadd.f32 %v850, %v994
  %v996 = vpop.f32.mrb[0].mxu0
  %997 = vmatprep.mubr.f32.mxu0 %v428
  %998 = vmatmul.mubr.f32.gmra.mrb[0].mxu0 %v427
  %v999 = vpop.f32.mrb[0].mxu0
  %v1000 = vadd.f32 %v855, %v999
  %v1001 = vpop.f32.mrb[0].mxu0
  %1002 = vmatprep.mubr.f32.mxu0 %v440
  %1003 = vmatmul.mubr.f32.gmra.mrb[0].mxu0 %v439
  %v1004 = vpop.f32.mrb[0].mxu0
  %v1005 = vadd.f32 %v860, %v1004
  %v1006 = vpop.f32.mrb[0].mxu0
  %1007 = vmatprep.mubr.f32.mxu0 %v452
  %1008 = vmatmul.mubr.f32.gmra.mrb[0].mxu0 %v451
  %v1009 = vpop.f32.mrb[0].mxu0
  %v1010 = vadd.f32 %v865, %v1009
  %v1011 = vpop.f32.mrb[0].mxu0
  %1012 = vmatprep.mubr.f32.mxu0 %v464
  %1013 = vmatmul.mubr.f32.gmra.mrb[0].mxu0 %v463
  %v1014 = vpop.f32.mrb[0].mxu0
  %v1015 = vadd.f32 %v870, %v1014
  %v1016 = vpop.f32.mrb[0].mxu0
  %1017 = vmatprep.mubr.f32.mxu0 %v476
  %1018 = vmatmul.mubr.f32.gmra.mrb[0].mxu0 %v475
  %v1019 = vpop.f32.mrb[0].mxu0
  %v1020 = vadd.f32 %v875, %v1019
  %v1021 = vpop.f32.mrb[0].mxu0
  %1022 = vmatprep.mubr.f32.mxu0 %v488
  %1023 = vmatmul.mubr.f32.gmra.mrb[0].mxu0 %v487
  %v1024 = vpop.f32.mrb[0].mxu0
  %v1025 = vadd.f32 %v880, %v1024
  %v1026 = vpop.f32.mrb[0].mxu0
  %1027 = vmatprep.mubr.f32.mxu0 %v500
  %1028 = vmatmul.mubr.f32.gmra.mrb[0].mxu0 %v499
  %v1029 = vpop.f32.mrb[0].mxu0
  %v1030 = vadd.f32 %v885, %v1029
  %v1031 = vpop.f32.mrb[0].mxu0
  %1032 = vmatprep.mubr.f32.mxu0 %v512
  %1033 = vmatmul.mubr.f32.gmra.mrb[0].mxu0 %v511
  %v1034 = vpop.f32.mrb[0].mxu0
  %v1035 = vadd.f32 %v890, %v1034
  %v1036 = vpop.f32.mrb[0].mxu0
  %1037 = vmatprep.mubr.f32.mxu0 %v524
  %1038 = vmatmul.mubr.f32.gmra.mrb[0].mxu0 %v523
  %v1039 = vpop.f32.mrb[0].mxu0
  %v1040 = vadd.f32 %v895, %v1039
  %v1041 = vpop.f32.mrb[0].mxu0
  %1042 = vmatprep.mubr.f32.mxu0 %v536
  %1043 = vmatmul.mubr.f32.gmra.mrb[0].mxu0 %v535
  %v1044 = vpop.f32.mrb[0].mxu0
  %v1045 = vadd.f32 %v900, %v1044
  %v1046 = vpop.f32.mrb[0].mxu0
  %1047 = vmatprep.mubr.f32.mxu0 %v548
  %1048 = vmatmul.mubr.f32.gmra.mrb[0].mxu0 %v547
  %v1049 = vpop.f32.mrb[0].mxu0
  %v1050 = vadd.f32 %v905, %v1049
  %v1051 = vpop.f32.mrb[0].mxu0
  %1052 = vmatprep.mubr.f32.mxu0 %v560
  %1053 = vmatmul.mubr.f32.gmra.mrb[0].mxu0 %v559
  %v1054 = vpop.f32.mrb[0].mxu0
  %v1055 = vadd.f32 %v910, %v1054
  %v1056 = vpop.f32.mrb[0].mxu0
  %1057 = vmatprep.mubr.f32.mxu0 %v572
  %1058 = vmatmul.mubr.f32.gmra.mrb[0].mxu0 %v571
  %v1059 = vpop.f32.mrb[0].mxu0
  %v1060 = vadd.f32 %v915, %v1059
  %v1061 = vpop.f32.mrb[0].mxu0
  %1062 = vdwg.mxu0
  %1063 = vmatprep.subr.mxu0 0.0
  %1064 = vmatpush1.msra.mxu0 %v295
  %1065 = vmatprep.subr.mxu0 0.0
  %1066 = vmatpush1.msra.mxu0 %v296
  %1067 = vmatprep.subr.mxu0 0.0
  %1068 = vmatpush1.msra.mxu0 %v297
  %1069 = vmatprep.subr.mxu0 0.0
  %1070 = vmatpush1.msra.mxu0 %v298
  %1071 = vmatprep.subr.mxu0 0.0
  %1072 = vmatpush1.msra.mxu0 %v299
  %1073 = vmatprep.subr.mxu0 0.0
  %1074 = vmatpush1.msra.mxu0 %v300
  %1075 = vmatprep.subr.mxu0 0.0
  %1076 = vmatpush1.msra.mxu0 %v301
  %1077 = vmatprep.subr.mxu0 0.0
  %1078 = vmatpush1.msra.mxu0 %v302
  %1079 = vmatprep.subr.mxu0 0.0
  %1080 = vmatpush1.msra.mxu0 %v303
  %1081 = vmatprep.subr.mxu0 0.0
  %1082 = vmatpush1.msra.mxu0 %v304
  %1083 = vmatprep.subr.mxu0 0.0
  %1084 = vmatpush1.msra.mxu0 %v305
  %1085 = vmatprep.subr.mxu0 0.0
  %1086 = vmatpush1.msra.mxu0 %v306
  %1087 = vmatprep.subr.mxu0 0.0
  %1088 = vmatpush1.msra.mxu0 %v307
  %1089 = vmatprep.subr.mxu0 0.0
  %1090 = vmatpush1.msra.mxu0 %v308
  %1091 = vmatprep.subr.mxu0 0.0
  %1092 = vmatpush1.msra.mxu0 %v309
  %1093 = vmatprep.subr.mxu0 0.0
  %1094 = vmatpush1.msra.mxu0 %v310
  %1095 = vmatprep.subr.mxu0 0.0
  %1096 = vmatpush1.msra.mxu0 %v311
  %1097 = vmatprep.subr.mxu0 0.0
  %1098 = vmatpush1.msra.mxu0 %v312
  %1099 = vmatprep.subr.mxu0 0.0
  %1100 = vmatpush1.msra.mxu0 %v313
  %1101 = vmatprep.subr.mxu0 0.0
  %1102 = vmatpush1.msra.mxu0 %v314
  %1103 = vmatprep.subr.mxu0 0.0
  %1104 = vmatpush1.msra.mxu0 %v315
  %1105 = vmatprep.subr.mxu0 0.0
  %1106 = vmatpush1.msra.mxu0 %v316
  %1107 = vmatprep.subr.mxu0 0.0
  %1108 = vmatpush1.msra.mxu0 %v317
  %1109 = vmatprep.subr.mxu0 0.0
  %1110 = vmatpush1.msra.mxu0 %v318
  %1111 = vmatprep.subr.mxu0 0.0
  %1112 = vmatpush1.msra.mxu0 %v319
  %1113 = vmatprep.subr.mxu0 0.0
  %1114 = vmatpush1.msra.mxu0 %v320
  %1115 = vmatprep.subr.mxu0 0.0
  %1116 = vmatpush1.msra.mxu0 %v321
  %1117 = vmatprep.subr.mxu0 0.0
  %1118 = vmatpush1.msra.mxu0 %v322
  %1119 = vmatprep.subr.mxu0 0.0
  %1120 = vmatpush1.msra.mxu0 %v323
  %1121 = vmatprep.subr.mxu0 0.0
  %1122 = vmatpush1.msra.mxu0 %v324
  %1123 = vmatprep.subr.mxu0 0.0
  %1124 = vmatpush1.msra.mxu0 %v325
  %1125 = vmatprep.subr.mxu0 0.0
  %1126 = vmatpush1.msra.mxu0 %v326
  %1127 = vmatprep.mubr.f32.mxu0 %v394
  %1128 = vmatmul.mubr.f32.gmra.mrb[0].mxu0 %v393
  %v1129 = vpop.f32.mrb[0].mxu0
  %v1130 = vadd.f32 %v985, %v1129
  %v1131 = vpop.f32.mrb[0].mxu0
  %1132 = vmatprep.mubr.f32.mxu0 %v406
  %1133 = vmatmul.mubr.f32.gmra.mrb[0].mxu0 %v405
  %v1134 = vpop.f32.mrb[0].mxu0
  %v1135 = vadd.f32 %v990, %v1134
  %v1136 = vpop.f32.mrb[0].mxu0
  %1137 = vmatprep.mubr.f32.mxu0 %v418
  %1138 = vmatmul.mubr.f32.gmra.mrb[0].mxu0 %v417
  %v1139 = vpop.f32.mrb[0].mxu0
  %v1140 = vadd.f32 %v995, %v1139
  %v1141 = vpop.f32.mrb[0].mxu0
  %1142 = vmatprep.mubr.f32.mxu0 %v430
  %1143 = vmatmul.mubr.f32.gmra.mrb[0].mxu0 %v429
  %v1144 = vpop.f32.mrb[0].mxu0
  %v1145 = vadd.f32 %v1000, %v1144
  %v1146 = vpop.f32.mrb[0].mxu0
  %1147 = vmatprep.mubr.f32.mxu0 %v442
  %1148 = vmatmul.mubr.f32.gmra.mrb[0].mxu0 %v441
  %v1149 = vpop.f32.mrb[0].mxu0
  %v1150 = vadd.f32 %v1005, %v1149
  %v1151 = vpop.f32.mrb[0].mxu0
  %1152 = vmatprep.mubr.f32.mxu0 %v454
  %1153 = vmatmul.mubr.f32.gmra.mrb[0].mxu0 %v453
  %v1154 = vpop.f32.mrb[0].mxu0
  %v1155 = vadd.f32 %v1010, %v1154
  %v1156 = vpop.f32.mrb[0].mxu0
  %1157 = vmatprep.mubr.f32.mxu0 %v466
  %1158 = vmatmul.mubr.f32.gmra.mrb[0].mxu0 %v465
  %v1159 = vpop.f32.mrb[0].mxu0
  %v1160 = vadd.f32 %v1015, %v1159
  %v1161 = vpop.f32.mrb[0].mxu0
  %1162 = vmatprep.mubr.f32.mxu0 %v478
  %1163 = vmatmul.mubr.f32.gmra.mrb[0].mxu0 %v477
  %v1164 = vpop.f32.mrb[0].mxu0
  %v1165 = vadd.f32 %v1020, %v1164
  %v1166 = vpop.f32.mrb[0].mxu0
  %1167 = vmatprep.mubr.f32.mxu0 %v490
  %1168 = vmatmul.mubr.f32.gmra.mrb[0].mxu0 %v489
  %v1169 = vpop.f32.mrb[0].mxu0
  %v1170 = vadd.f32 %v1025, %v1169
  %v1171 = vpop.f32.mrb[0].mxu0
  %1172 = vmatprep.mubr.f32.mxu0 %v502
  %1173 = vmatmul.mubr.f32.gmra.mrb[0].mxu0 %v501
  %v1174 = vpop.f32.mrb[0].mxu0
  %v1175 = vadd.f32 %v1030, %v1174
  %v1176 = vpop.f32.mrb[0].mxu0
  %1177 = vmatprep.mubr.f32.mxu0 %v514
  %1178 = vmatmul.mubr.f32.gmra.mrb[0].mxu0 %v513
  %v1179 = vpop.f32.mrb[0].mxu0
  %v1180 = vadd.f32 %v1035, %v1179
  %v1181 = vpop.f32.mrb[0].mxu0
  %1182 = vmatprep.mubr.f32.mxu0 %v526
  %1183 = vmatmul.mubr.f32.gmra.mrb[0].mxu0 %v525
  %v1184 = vpop.f32.mrb[0].mxu0
  %v1185 = vadd.f32 %v1040, %v1184
  %v1186 = vpop.f32.mrb[0].mxu0
  %1187 = vmatprep.mubr.f32.mxu0 %v538
  %1188 = vmatmul.mubr.f32.gmra.mrb[0].mxu0 %v537
  %v1189 = vpop.f32.mrb[0].mxu0
  %v1190 = vadd.f32 %v1045, %v1189
  %v1191 = vpop.f32.mrb[0].mxu0
  %1192 = vmatprep.mubr.f32.mxu0 %v550
  %1193 = vmatmul.mubr.f32.gmra.mrb[0].mxu0 %v549
  %v1194 = vpop.f32.mrb[0].mxu0
  %v1195 = vadd.f32 %v1050, %v1194
  %v1196 = vpop.f32.mrb[0].mxu0
  %1197 = vmatprep.mubr.f32.mxu0 %v562
  %1198 = vmatmul.mubr.f32.gmra.mrb[0].mxu0 %v561
  %v1199 = vpop.f32.mrb[0].mxu0
  %v1200 = vadd.f32 %v1055, %v1199
  %v1201 = vpop.f32.mrb[0].mxu0
  %1202 = vmatprep.mubr.f32.mxu0 %v574
  %1203 = vmatmul.mubr.f32.gmra.mrb[0].mxu0 %v573
  %v1204 = vpop.f32.mrb[0].mxu0
  %v1205 = vadd.f32 %v1060, %v1204
  %v1206 = vpop.f32.mrb[0].mxu0
  %1207 = vdwg.mxu0
  %1208 = vmatprep.subr.mxu0 0.0
  %1209 = vmatpush1.msra.mxu0 %v327
  %1210 = vmatprep.subr.mxu0 0.0
  %1211 = vmatpush1.msra.mxu0 %v328
  %1212 = vmatprep.subr.mxu0 0.0
  %1213 = vmatpush1.msra.mxu0 %v329
  %1214 = vmatprep.subr.mxu0 0.0
  %1215 = vmatpush1.msra.mxu0 %v330
  %1216 = vmatprep.subr.mxu0 0.0
  %1217 = vmatpush1.msra.mxu0 %v331
  %1218 = vmatprep.subr.mxu0 0.0
  %1219 = vmatpush1.msra.mxu0 %v332
  %1220 = vmatprep.subr.mxu0 0.0
  %1221 = vmatpush1.msra.mxu0 %v333
  %1222 = vmatprep.subr.mxu0 0.0
  %1223 = vmatpush1.msra.mxu0 %v334
  %1224 = vmatprep.subr.mxu0 0.0
  %1225 = vmatpush1.msra.mxu0 %v335
  %1226 = vmatprep.subr.mxu0 0.0
  %1227 = vmatpush1.msra.mxu0 %v336
  %1228 = vmatprep.subr.mxu0 0.0
  %1229 = vmatpush1.msra.mxu0 %v337
  %1230 = vmatprep.subr.mxu0 0.0
  %1231 = vmatpush1.msra.mxu0 %v338
  %1232 = vmatprep.subr.mxu0 0.0
  %1233 = vmatpush1.msra.mxu0 %v339
  %1234 = vmatprep.subr.mxu0 0.0
  %1235 = vmatpush1.msra.mxu0 %v340
  %1236 = vmatprep.subr.mxu0 0.0
  %1237 = vmatpush1.msra.mxu0 %v341
  %1238 = vmatprep.subr.mxu0 0.0
  %1239 = vmatpush1.msra.mxu0 %v342
  %1240 = vmatprep.subr.mxu0 0.0
  %1241 = vmatpush1.msra.mxu0 %v343
  %1242 = vmatprep.subr.mxu0 0.0
  %1243 = vmatpush1.msra.mxu0 %v344
  %1244 = vmatprep.subr.mxu0 0.0
  %1245 = vmatpush1.msra.mxu0 %v345
  %1246 = vmatprep.subr.mxu0 0.0
  %1247 = vmatpush1.msra.mxu0 %v346
  %1248 = vmatprep.subr.mxu0 0.0
  %1249 = vmatpush1.msra.mxu0 %v347
  %1250 = vmatprep.subr.mxu0 0.0
  %1251 = vmatpush1.msra.mxu0 %v348
  %1252 = vmatprep.subr.mxu0 0.0
  %1253 = vmatpush1.msra.mxu0 %v349
  %1254 = vmatprep.subr.mxu0 0.0
  %1255 = vmatpush1.msra.mxu0 %v350
  %1256 = vmatprep.subr.mxu0 0.0
  %1257 = vmatpush1.msra.mxu0 %v351
  %1258 = vmatprep.subr.mxu0 0.0
  %1259 = vmatpush1.msra.mxu0 %v352
  %1260 = vmatprep.subr.mxu0 0.0
  %1261 = vmatpush1.msra.mxu0 %v353
  %1262 = vmatprep.subr.mxu0 0.0
  %1263 = vmatpush1.msra.mxu0 %v354
  %1264 = vmatprep.subr.mxu0 0.0
  %1265 = vmatpush1.msra.mxu0 %v355
  %1266 = vmatprep.subr.mxu0 0.0
  %1267 = vmatpush1.msra.mxu0 %v356
  %1268 = vmatprep.subr.mxu0 0.0
  %1269 = vmatpush1.msra.mxu0 %v357
  %1270 = vmatprep.subr.mxu0 0.0
  %1271 = vmatpush1.msra.mxu0 %v358
  %1272 = vmatprep.mubr.f32.mxu0 %v396
  %1273 = vmatmul.mubr.f32.gmra.mrb[0].mxu0 %v395
  %v1274 = vpop.f32.mrb[0].mxu0
  %v1275 = vadd.f32 %v1130, %v1274
  %v1276 = vpop.f32.mrb[0].mxu0
  %1277 = vmatprep.mubr.f32.mxu0 %v408
  %1278 = vmatmul.mubr.f32.gmra.mrb[0].mxu0 %v407
  %v1279 = vpop.f32.mrb[0].mxu0
  %v1280 = vadd.f32 %v1135, %v1279
  %v1281 = vpop.f32.mrb[0].mxu0
  %1282 = vmatprep.mubr.f32.mxu0 %v420
  %1283 = vmatmul.mubr.f32.gmra.mrb[0].mxu0 %v419
  %v1284 = vpop.f32.mrb[0].mxu0
  %v1285 = vadd.f32 %v1140, %v1284
  %v1286 = vpop.f32.mrb[0].mxu0
  %1287 = vmatprep.mubr.f32.mxu0 %v432
  %1288 = vmatmul.mubr.f32.gmra.mrb[0].mxu0 %v431
  %v1289 = vpop.f32.mrb[0].mxu0
  %v1290 = vadd.f32 %v1145, %v1289
  %v1291 = vpop.f32.mrb[0].mxu0
  %1292 = vmatprep.mubr.f32.mxu0 %v444
  %1293 = vmatmul.mubr.f32.gmra.mrb[0].mxu0 %v443
  %v1294 = vpop.f32.mrb[0].mxu0
  %v1295 = vadd.f32 %v1150, %v1294
  %v1296 = vpop.f32.mrb[0].mxu0
  %1297 = vmatprep.mubr.f32.mxu0 %v456
  %1298 = vmatmul.mubr.f32.gmra.mrb[0].mxu0 %v455
  %v1299 = vpop.f32.mrb[0].mxu0
  %v1300 = vadd.f32 %v1155, %v1299
  %v1301 = vpop.f32.mrb[0].mxu0
  %1302 = vmatprep.mubr.f32.mxu0 %v468
  %1303 = vmatmul.mubr.f32.gmra.mrb[0].mxu0 %v467
  %v1304 = vpop.f32.mrb[0].mxu0
  %v1305 = vadd.f32 %v1160, %v1304
  %v1306 = vpop.f32.mrb[0].mxu0
  %1307 = vmatprep.mubr.f32.mxu0 %v480
  %1308 = vmatmul.mubr.f32.gmra.mrb[0].mxu0 %v479
  %v1309 = vpop.f32.mrb[0].mxu0
  %v1310 = vadd.f32 %v1165, %v1309
  %v1311 = vpop.f32.mrb[0].mxu0
  %1312 = vmatprep.mubr.f32.mxu0 %v492
  %1313 = vmatmul.mubr.f32.gmra.mrb[0].mxu0 %v491
  %v1314 = vpop.f32.mrb[0].mxu0
  %v1315 = vadd.f32 %v1170, %v1314
  %v1316 = vpop.f32.mrb[0].mxu0
  %1317 = vmatprep.mubr.f32.mxu0 %v504
  %1318 = vmatmul.mubr.f32.gmra.mrb[0].mxu0 %v503
  %v1319 = vpop.f32.mrb[0].mxu0
  %v1320 = vadd.f32 %v1175, %v1319
  %v1321 = vpop.f32.mrb[0].mxu0
  %1322 = vmatprep.mubr.f32.mxu0 %v516
  %1323 = vmatmul.mubr.f32.gmra.mrb[0].mxu0 %v515
  %v1324 = vpop.f32.mrb[0].mxu0
  %v1325 = vadd.f32 %v1180, %v1324
  %v1326 = vpop.f32.mrb[0].mxu0
  %1327 = vmatprep.mubr.f32.mxu0 %v528
  %1328 = vmatmul.mubr.f32.gmra.mrb[0].mxu0 %v527
  %v1329 = vpop.f32.mrb[0].mxu0
  %v1330 = vadd.f32 %v1185, %v1329
  %v1331 = vpop.f32.mrb[0].mxu0
  %1332 = vmatprep.mubr.f32.mxu0 %v540
  %1333 = vmatmul.mubr.f32.gmra.mrb[0].mxu0 %v539
  %v1334 = vpop.f32.mrb[0].mxu0
  %v1335 = vadd.f32 %v1190, %v1334
  %v1336 = vpop.f32.mrb[0].mxu0
  %1337 = vmatprep.mubr.f32.mxu0 %v552
  %1338 = vmatmul.mubr.f32.gmra.mrb[0].mxu0 %v551
  %v1339 = vpop.f32.mrb[0].mxu0
  %v1340 = vadd.f32 %v1195, %v1339
  %v1341 = vpop.f32.mrb[0].mxu0
  %1342 = vmatprep.mubr.f32.mxu0 %v564
  %1343 = vmatmul.mubr.f32.gmra.mrb[0].mxu0 %v563
  %v1344 = vpop.f32.mrb[0].mxu0
  %v1345 = vadd.f32 %v1200, %v1344
  %v1346 = vpop.f32.mrb[0].mxu0
  %1347 = vmatprep.mubr.f32.mxu0 %v576
  %1348 = vmatmul.mubr.f32.gmra.mrb[0].mxu0 %v575
  %v1349 = vpop.f32.mrb[0].mxu0
  %v1350 = vadd.f32 %v1205, %v1349
  %v1351 = vpop.f32.mrb[0].mxu0
  %1352 = vdwg.mxu0
  %1353 = vmatprep.subr.mxu0 0.0
  %1354 = vmatpush1.msra.mxu0 %v359
  %1355 = vmatprep.subr.mxu0 0.0
  %1356 = vmatpush1.msra.mxu0 %v360
  %1357 = vmatprep.subr.mxu0 0.0
  %1358 = vmatpush1.msra.mxu0 %v361
  %1359 = vmatprep.subr.mxu0 0.0
  %1360 = vmatpush1.msra.mxu0 %v362
  %1361 = vmatprep.subr.mxu0 0.0
  %1362 = vmatpush1.msra.mxu0 %v363
  %1363 = vmatprep.subr.mxu0 0.0
  %1364 = vmatpush1.msra.mxu0 %v364
  %1365 = vmatprep.subr.mxu0 0.0
  %1366 = vmatpush1.msra.mxu0 %v365
  %1367 = vmatprep.subr.mxu0 0.0
  %1368 = vmatpush1.msra.mxu0 %v366
  %1369 = vmatprep.subr.mxu0 0.0
  %1370 = vmatpush1.msra.mxu0 %v367
  %1371 = vmatprep.subr.mxu0 0.0
  %1372 = vmatpush1.msra.mxu0 %v368
  %1373 = vmatprep.subr.mxu0 0.0
  %1374 = vmatpush1.msra.mxu0 %v369
  %1375 = vmatprep.subr.mxu0 0.0
  %1376 = vmatpush1.msra.mxu0 %v370
  %1377 = vmatprep.subr.mxu0 0.0
  %1378 = vmatpush1.msra.mxu0 %v371
  %1379 = vmatprep.subr.mxu0 0.0
  %1380 = vmatpush1.msra.mxu0 %v372
  %1381 = vmatprep.subr.mxu0 0.0
  %1382 = vmatpush1.msra.mxu0 %v373
  %1383 = vmatprep.subr.mxu0 0.0
  %1384 = vmatpush1.msra.mxu0 %v374
  %1385 = vmatprep.subr.mxu0 0.0
  %1386 = vmatpush1.msra.mxu0 %v375
  %1387 = vmatprep.subr.mxu0 0.0
  %1388 = vmatpush1.msra.mxu0 %v376
  %1389 = vmatprep.subr.mxu0 0.0
  %1390 = vmatpush1.msra.mxu0 %v377
  %1391 = vmatprep.subr.mxu0 0.0
  %1392 = vmatpush1.msra.mxu0 %v378
  %1393 = vmatprep.subr.mxu0 0.0
  %1394 = vmatpush1.msra.mxu0 %v379
  %1395 = vmatprep.subr.mxu0 0.0
  %1396 = vmatpush1.msra.mxu0 %v380
  %1397 = vmatprep.subr.mxu0 0.0
  %1398 = vmatpush1.msra.mxu0 %v381
  %1399 = vmatprep.subr.mxu0 0.0
  %1400 = vmatpush1.msra.mxu0 %v382
  %1401 = vmatprep.subr.mxu0 0.0
  %1402 = vmatpush1.msra.mxu0 %v383
  %1403 = vmatprep.subr.mxu0 0.0
  %1404 = vmatpush1.msra.mxu0 %v384
  %1405 = vmatprep.subr.mxu0 0.0
  %1406 = vmatpush1.msra.mxu0 %v385
  %1407 = vmatprep.subr.mxu0 0.0
  %1408 = vmatpush1.msra.mxu0 %v386
  %1409 = vmatprep.subr.mxu0 0.0
  %1410 = vmatpush1.msra.mxu0 0.0
  %1411 = vmatprep.subr.mxu0 0.0
  %1412 = vmatpush1.msra.mxu0 0.0
  %1413 = vmatprep.subr.mxu0 0.0
  %1414 = vmatpush1.msra.mxu0 0.0
  %1415 = vmatprep.subr.mxu0 0.0
  %1416 = vmatpush1.msra.mxu0 0.0
  %1417 = vmatprep.mubr.f32.mxu0 %v581
  %1418 = vmatmul.mubr.f32.gmra.mrb[0].mxu0 %v397
  %v1419 = vpop.f32.mrb[0].mxu0
  %v1420 = vadd.f32 %v1275, %v1419
  %v1421 = vpop.f32.mrb[0].mxu0
  %1422 = vmatprep.mubr.f32.mxu0 %v584
  %1423 = vmatmul.mubr.f32.gmra.mrb[0].mxu0 %v409
  %v1424 = vpop.f32.mrb[0].mxu0
  %v1425 = vadd.f32 %v1280, %v1424
  %v1426 = vpop.f32.mrb[0].mxu0
  %1427 = vmatprep.mubr.f32.mxu0 %v587
  %1428 = vmatmul.mubr.f32.gmra.mrb[0].mxu0 %v421
  %v1429 = vpop.f32.mrb[0].mxu0
  %v1430 = vadd.f32 %v1285, %v1429
  %v1431 = vpop.f32.mrb[0].mxu0
  %1432 = vmatprep.mubr.f32.mxu0 %v590
  %1433 = vmatmul.mubr.f32.gmra.mrb[0].mxu0 %v433
  %v1434 = vpop.f32.mrb[0].mxu0
  %v1435 = vadd.f32 %v1290, %v1434
  %v1436 = vpop.f32.mrb[0].mxu0
  %1437 = vmatprep.mubr.f32.mxu0 %v593
  %1438 = vmatmul.mubr.f32.gmra.mrb[0].mxu0 %v445
  %v1439 = vpop.f32.mrb[0].mxu0
  %v1440 = vadd.f32 %v1295, %v1439
  %v1441 = vpop.f32.mrb[0].mxu0
  %1442 = vmatprep.mubr.f32.mxu0 %v596
  %1443 = vmatmul.mubr.f32.gmra.mrb[0].mxu0 %v457
  %v1444 = vpop.f32.mrb[0].mxu0
  %v1445 = vadd.f32 %v1300, %v1444
  %v1446 = vpop.f32.mrb[0].mxu0
  %1447 = vmatprep.mubr.f32.mxu0 %v599
  %1448 = vmatmul.mubr.f32.gmra.mrb[0].mxu0 %v469
  %v1449 = vpop.f32.mrb[0].mxu0
  %v1450 = vadd.f32 %v1305, %v1449
  %v1451 = vpop.f32.mrb[0].mxu0
  %1452 = vmatprep.mubr.f32.mxu0 %v602
  %1453 = vmatmul.mubr.f32.gmra.mrb[0].mxu0 %v481
  %v1454 = vpop.f32.mrb[0].mxu0
  %v1455 = vadd.f32 %v1310, %v1454
  %v1456 = vpop.f32.mrb[0].mxu0
  %1457 = vmatprep.mubr.f32.mxu0 %v605
  %1458 = vmatmul.mubr.f32.gmra.mrb[0].mxu0 %v493
  %v1459 = vpop.f32.mrb[0].mxu0
  %v1460 = vadd.f32 %v1315, %v1459
  %v1461 = vpop.f32.mrb[0].mxu0
  %1462 = vmatprep.mubr.f32.mxu0 %v608
  %1463 = vmatmul.mubr.f32.gmra.mrb[0].mxu0 %v505
  %v1464 = vpop.f32.mrb[0].mxu0
  %v1465 = vadd.f32 %v1320, %v1464
  %v1466 = vpop.f32.mrb[0].mxu0
  %1467 = vmatprep.mubr.f32.mxu0 %v611
  %1468 = vmatmul.mubr.f32.gmra.mrb[0].mxu0 %v517
  %v1469 = vpop.f32.mrb[0].mxu0
  %v1470 = vadd.f32 %v1325, %v1469
  %v1471 = vpop.f32.mrb[0].mxu0
  %1472 = vmatprep.mubr.f32.mxu0 %v614
  %1473 = vmatmul.mubr.f32.gmra.mrb[0].mxu0 %v529
  %v1474 = vpop.f32.mrb[0].mxu0
  %v1475 = vadd.f32 %v1330, %v1474
  %v1476 = vpop.f32.mrb[0].mxu0
  %1477 = vmatprep.mubr.f32.mxu0 %v617
  %1478 = vmatmul.mubr.f32.gmra.mrb[0].mxu0 %v541
  %v1479 = vpop.f32.mrb[0].mxu0
  %v1480 = vadd.f32 %v1335, %v1479
  %v1481 = vpop.f32.mrb[0].mxu0
  %1482 = vmatprep.mubr.f32.mxu0 %v620
  %1483 = vmatmul.mubr.f32.gmra.mrb[0].mxu0 %v553
  %v1484 = vpop.f32.mrb[0].mxu0
  %v1485 = vadd.f32 %v1340, %v1484
  %v1486 = vpop.f32.mrb[0].mxu0
  %1487 = vmatprep.mubr.f32.mxu0 %v623
  %1488 = vmatmul.mubr.f32.gmra.mrb[0].mxu0 %v565
  %v1489 = vpop.f32.mrb[0].mxu0
  %v1490 = vadd.f32 %v1345, %v1489
  %v1491 = vpop.f32.mrb[0].mxu0
  %1492 = vmatprep.mubr.f32.mxu0 %v626
  %1493 = vmatmul.mubr.f32.gmra.mrb[0].mxu0 %v577
  %v1494 = vpop.f32.mrb[0].mxu0
  %v1495 = vadd.f32 %v1350, %v1494
  %v1496 = vpop.f32.mrb[0].mxu0
  %1497 = vdwg.mxu0
  %vm1498 = vcmask 400384
  %1499 = vst.msk [vmem:[%s2] sm:$0xff] %vm1498, %v1420
  %1500 = vst.msk [vmem:[%s2 + $0x8] sm:$0xff] %vm1498, %v1425
  %1501 = vst.msk [vmem:[%s2 + $0x10] sm:$0xff] %vm1498, %v1430
  %1502 = vst.msk [vmem:[%s2 + $0x18] sm:$0xff] %vm1498, %v1435
  %1503 = vst.msk [vmem:[%s2 + $0x20] sm:$0xff] %vm1498, %v1440
  %1504 = vst.msk [vmem:[%s2 + $0x28] sm:$0xff] %vm1498, %v1445
  %1505 = vst.msk [vmem:[%s2 + $0x30] sm:$0xff] %vm1498, %v1450
  %1506 = vst.msk [vmem:[%s2 + $0x38] sm:$0xff] %vm1498, %v1455
  %1507 = vst.msk [vmem:[%s2 + $0x40] sm:$0xff] %vm1498, %v1460
  %1508 = vst.msk [vmem:[%s2 + $0x48] sm:$0xff] %vm1498, %v1465
  %1509 = vst.msk [vmem:[%s2 + $0x50] sm:$0xff] %vm1498, %v1470
  %1510 = vst.msk [vmem:[%s2 + $0x58] sm:$0xff] %vm1498, %v1475
  %1511 = vst.msk [vmem:[%s2 + $0x60] sm:$0xff] %vm1498, %v1480
  %1512 = vst.msk [vmem:[%s2 + $0x68] sm:$0xff] %vm1498, %v1485
  %1513 = vst.msk [vmem:[%s2 + $0x70] sm:$0xff] %vm1498, %v1490
  %1514 = vst.msk [vmem:[%s2 + $0x78] sm:$0xff] %vm1498, %v1495
  // Predicated region
  $region10: #{tpu_custom_call.1} parent=0 // pred_check
    _
  $region11: #{tpu_custom_call.1} parent=0 // pred_check_branch
    %1516 = sbr.rel (0) target = $region13
  $region12: #{tpu_custom_call.1} parent=0 // pred_region
    _
  $region13: #{tpu_custom_call.1} parent=0 // pred_fallthru
    _
  // Predicated region
  $region14: #{tpu_custom_call.1} parent=0 // pred_check
    _
  $region15: #{tpu_custom_call.1} parent=0 // pred_check_branch
    %1518 = sbr.rel (0) target = $region17
  $region16: #{tpu_custom_call.1} parent=0 // pred_region
    _
  $region17: #{tpu_custom_call.1} parent=0 // pred_fallthru
    _

</llo_original>
